<compile_context>
chip_gen: v7x
topology: tpu7x:2x2x1
jax: 0.10.0
libtpu: 0.0.40
codegen_flags: <defaults>
</compile_context>

<pallas_src>
import functools

import jax
import jax.numpy as jnp
from jax.experimental import pallas as pl
from jax.experimental.pallas import tpu as pltpu

LANES = 128  # lane width / padded feature dimension


def _round_up(x, m):
    return ((x + m - 1) // m) * m


def _gcn_layer_kernel(c_ref, h_ref, dinv_ref, b_ref, w_ref, o_ref, acc_ref, *,
                      fuse_relu_proj):
    """One (row-tile, K-tile) step of a GCN layer.

    acc += C[i,k] @ H[k]   (int8 counts upcast to bf16, f32 accumulation)
    epilogue (k == last):  y = dinv_rows * acc + b
      layer 1: o = bf16( dinv_rows * (relu(y) @ W2Wf) )   (fused projection,
               already scaled as layer-2 input)
      layer 2: o = f32(y)
    """
    k = pl.program_id(1)

    @pl.when(k == 0)
    def _():
        acc_ref[...] = jnp.zeros_like(acc_ref)

    # int8 edge counts -> bf16 (exact for counts < 256); MXU matmul, f32 acc.
    a_tile = c_ref[...].astype(jnp.float32).astype(jnp.bfloat16)
    acc_ref[...] += jnp.dot(a_tile, h_ref[...],
                            preferred_element_type=jnp.float32)

    @pl.when(k == pl.num_programs(1) - 1)
    def _():
        y = dinv_ref[...] * acc_ref[...] + b_ref[...]
        if fuse_relu_proj:
            y = jnp.maximum(y, 0.0)                         # ReLU
            # Fused inter-layer projection (H1 @ (W2 @ Wf)) plus the next
            # layer's column-side D^-1/2 scaling: layer 2 consumes this
            # output directly, with no wrapper matmul / f32 HBM round-trip.
            y = jnp.dot(y.astype(jnp.bfloat16), w_ref[...],
                        preferred_element_type=jnp.float32)
            y = dinv_ref[...] * y
        o_ref[...] = y.astype(o_ref.dtype)


def _gcn_layer(counts_i8, h_scaled, dinv_col, bias, w_proj, *,
               fuse_relu_proj, out_dtype, tm, tk):
    """out[n_pad,128] = epilogue(C @ h_scaled), streaming int8 C tiles."""
    n_pad = counts_i8.shape[0]
    grid = (n_pad // tm, n_pad // tk)            # contraction axis innermost
    kernel = functools.partial(_gcn_layer_kernel,
                               fuse_relu_proj=fuse_relu_proj)
    return pl.pallas_call(
        kernel,
        out_shape=jax.ShapeDtypeStruct((n_pad, LANES), out_dtype),
        grid_spec=pltpu.PrefetchScalarGridSpec(
            num_scalar_prefetch=0,
            grid=grid,
            in_specs=[
                # Streamed int8 (dst-row, src-col) edge-count tile.
                pl.BlockSpec((tm, tk), lambda i, k: (i, k)),
                # dinv-scaled, pre-projected features for this K slice (bf16).
                pl.BlockSpec((tk, LANES), lambda i, k: (k, 0)),
                # Row-side D^-1/2 slice for this row tile.
                pl.BlockSpec((tm, 1), lambda i, k: (i, 0)),
                # Bias row (tiny; constant block index -> DMA'd once).
                pl.BlockSpec((1, LANES), lambda i, k: (0, 0)),
                # Fused projection weight (32 KiB bf16; constant block index).
                pl.BlockSpec((LANES, LANES), lambda i, k: (0, 0)),
            ],
            out_specs=pl.BlockSpec((tm, LANES), lambda i, k: (i, 0)),
            scratch_shapes=[pltpu.VMEM((tm, LANES), jnp.float32)],
        ),
        compiler_params=pltpu.CompilerParams(
            # Row tiles are independent -> shard across TensorCores (v7x);
            # K is a reduction into the VMEM accumulator -> "arbitrary".
            dimension_semantics=("parallel", "arbitrary"),
            # ~4 MiB used at tm=512/tk=2048; 48 MiB is safe on every
            # generation (v7x physical VMEM = 64 MiB) and leaves headroom to
            # raise block_cols to 4096-8192 on v5e/v6e.
            vmem_limit_bytes=48 * 1024 * 1024,
        ),
    )(counts_i8, h_scaled, dinv_col, bias, w_proj)


def gcn_forward(x, edge_index, params, *, block_rows=512, block_cols=2048):
    """GCN forward.  x: [N, 9] f32, edge_index: [2, E] int32 (row 0 = src)."""
    n, f_in = x.shape
    w1, b1, w2, b2, wf, bf = params
    f_h1 = w1.shape[1]
    f_out = wf.shape[1]

    # ---- tile / padding choices: tm | tk | n_pad, all multiples of 128 ----
    n_128 = _round_up(n, 128)
    tm = min(block_rows, n_128)
    tk = _round_up(min(block_cols, n_128), tm)
    n_pad = _round_up(n_128, tk)

    # ---- adjacency as exact int8 edge counts, built directly padded -------
    # PyG gcn_norm semantics: duplicate edges scatter-add into the weight,
    # explicit self-loops dropped and replaced by weight-1 self-loops,
    # symmetric D^-1/2 (A+I) D^-1/2 normalization (applied outside C).
    src, dst = edge_index[0], edge_index[1]
    not_loop = src != dst
    counts = (jnp.zeros((n_pad, n_pad), jnp.int8)
              .at[dst, src].add(not_loop.astype(jnp.int8)))
    diag = jnp.arange(n)
    counts = counts.at[diag, diag].add(jnp.ones((n,), jnp.int8))
    # TODO(synk): int8 counts assume < 128 duplicate edges per (dst, src) pair.

    # Degrees / D^-1/2 straight from the edge list (no dense f32 temporary).
    deg = (jnp.zeros((n_pad,), jnp.float32)
           .at[dst].add(not_loop.astype(jnp.float32))
           .at[diag].add(1.0))
    dinv = jnp.where(deg > 0.0, jax.lax.rsqrt(deg), 0.0)
    dinv_col = dinv[:, None]                                    # [n_pad, 1]

    # ---- padded weights / biases ----
    x_pad = jnp.zeros((n_pad, LANES), jnp.float32).at[:n, :f_in].set(x)
    w1p = jnp.zeros((LANES, LANES), jnp.float32).at[:f_in, :f_h1].set(w1)
    b1p = jnp.zeros((1, LANES), jnp.float32).at[0, :f_h1].set(b1)

    # Fold fc1 (Linear 10->1) into conv2:
    #   (A@(H@W2)+b2)@Wf+bf == A@(H@(W2@Wf)) + (b2@Wf+bf).
    w2f = w2 @ wf                                               # [16, 1]
    b2f = b2 @ wf + bf                                          # [1]
    w2fp = (jnp.zeros((LANES, LANES), jnp.float32)
            .at[:f_h1, :f_out].set(w2f)).astype(jnp.bfloat16)
    b2fp = jnp.zeros((1, LANES), jnp.float32).at[0, :f_out].set(b2f)

    # ---- layer 1: h1 = relu(A_hat @ (X@W1) + b1).  The kernel epilogue
    #      directly emits the dinv-scaled, projected layer-2 input
    #      g = dinv * (h1 @ (W2@Wf)) in bf16.
    h0s = (dinv_col * (x_pad @ w1p)).astype(jnp.bfloat16)       # hoisted proj
    g = _gcn_layer(counts, h0s, dinv_col, b1p, w2fp,
                   fuse_relu_proj=True, out_dtype=jnp.bfloat16, tm=tm, tk=tk)

    # TODO(synk): F.dropout is identity in eval mode; training-mode dropout
    # would use pltpu.prng_seed / pltpu.prng_random_bits in the epilogue.

    # ---- layer 2 (+ folded Linear): out = A_hat @ (h1 @ W2Wf) + (b2Wf+bf) --
    out_pad = _gcn_layer(counts, g, dinv_col, b2fp, w2fp,
                         fuse_relu_proj=False, out_dtype=jnp.float32,
                         tm=tm, tk=tk)
    return out_pad[:n, :f_out]


def init_params(key):
    k1, k2, k3, k4, k5, k6 = jax.random.split(key, 6)

    def glorot(k, shape):
        fan_in, fan_out = shape
        lim = jnp.sqrt(6.0 / (fan_in + fan_out))
        return jax.random.uniform(k, shape, jnp.float32, -lim, lim)

    w1 = glorot(k1, (9, 16))
    b1 = 0.1 * jax.random.normal(k2, (16,), jnp.float32)
    w2 = glorot(k3, (16, 10))
    b2 = 0.1 * jax.random.normal(k4, (10,), jnp.float32)
    wf = glorot(k5, (10, 1))
    bf = 0.1 * jax.random.normal(k6, (1,), jnp.float32)
    return (w1, b1, w2, b2, wf, bf)


if __name__ == "__main__":
    key = jax.random.PRNGKey(0)
    kx, ke, kp = jax.random.split(key, 3)

    N, E = 16, 32                       # small synthetic graph
    x = jax.random.normal(kx, (N, 9), jnp.float32)
    edge_index = jax.random.randint(ke, (2, E), 0, N, dtype=jnp.int32)
    params = init_params(kp)

    out = jax.jit(gcn_forward)(x, edge_index, params)
    jax.block_until_ready(out)
    assert out.shape == (N, 1), out.shape

    w1, b1, w2, b2, wf, bf = params
    src, dst = edge_index[0], edge_index[1]
    not_loop = (src != dst).astype(jnp.float32)
    c = jnp.zeros((N, N), jnp.float32).at[dst, src].add(not_loop)
    c = c + jnp.eye(N, dtype=jnp.float32)
    deg = jnp.sum(c, axis=1)
    dinv = jnp.where(deg > 0.0, jax.lax.rsqrt(deg), 0.0)

    # (a) Mirror of the kernel's exact precision path (int counts in bf16,
    #     bf16 projections, f32 accumulation, fused epilogue) -> tight check.
    c_bf = c.astype(jnp.bfloat16)
    w2f = w2 @ wf
    b2f = b2 @ wf + bf
    h0s_ref = (dinv[:, None] * (x @ w1)).astype(jnp.bfloat16)
    acc1 = jnp.dot(c_bf, h0s_ref, preferred_element_type=jnp.float32)
    h1_ref = jnp.maximum(dinv[:, None] * acc1 + b1, 0.0)
    g_ref = (dinv[:, None] * jnp.dot(h1_ref.astype(jnp.bfloat16),
                                     w2f.astype(jnp.bfloat16),
                                     preferred_element_type=jnp.float32)
             ).astype(jnp.bfloat16)
    acc2 = jnp.dot(c_bf, g_ref, preferred_element_type=jnp.float32)
    ref_mirror = dinv[:, None] * acc2 + b2f
    err_m = float(jnp.max(jnp.abs(out - ref_mirror)))
    assert jnp.allclose(out, ref_mirror, atol=1e-2, rtol=1e-2), err_m

    # (b) Full-f32 semantics of the PyTorch module -> loose check (the only
    #     deviations are the bf16 feature projections / intermediate).
    a_hat = dinv[:, None] * c * dinv[None, :]
    h1_f32 = jnp.maximum(a_hat @ (x @ w1) + b1, 0.0)
    ref_f32 = (a_hat @ (h1_f32 @ w2) + b2) @ wf + bf
    err_f = float(jnp.max(jnp.abs(out - ref_f32)))
    assert jnp.allclose(out, ref_f32, atol=1e-1, rtol=1e-1), err_f

    print("KERNEL_OK")
</pallas_src>

<mosaic_0001>
module attributes {stable_mosaic.version = 11 : i64} {
  func.func private @main(%arg0: i32) attributes {dimension_semantics = [#tpu.dimension_semantics<core_parallel>], iteration_bounds = array<i64: 2>, tpu.core_type = #tpu.core_type<sc_scalar_subcore>, window_params = []} {
    return
  }
}

module attributes {stable_mosaic.version = 11 : i64} {
  func.func private @main(%arg0: i32) attributes {dimension_semantics = [#tpu.dimension_semantics<core_parallel>], iteration_bounds = array<i64: 2>, tpu.core_type = #tpu.core_type<sc_scalar_subcore>, window_params = []} {
    return
  }
}

module attributes {stable_mosaic.version = 11 : i64} {
  func.func @_gcn_layer_kernel(%arg0: i32, %arg1: i32, %arg2: memref<128x128xi8, #tpu.memory_space<vmem>>, %arg3: memref<128x128xbf16, #tpu.memory_space<vmem>>, %arg4: memref<128x1xf32, #tpu.memory_space<vmem>>, %arg5: memref<1x128xf32, #tpu.memory_space<vmem>>, %arg6: memref<128x128xbf16, #tpu.memory_space<vmem>>, %arg7: memref<128x128xbf16, #tpu.memory_space<vmem>>, %arg8: memref<128x128xf32, #tpu.memory_space<vmem>>) attributes {dimension_semantics = [#tpu.dimension_semantics<parallel>, #tpu.dimension_semantics<arbitrary>], iteration_bounds = array<i64: 1, 1>, scalar_prefetch = 0 : i64, scratch_operands = 1 : i64, tpu.core_type = #tpu.core_type<tc>, window_params = [{transform_indices = @transform_0, window_bounds = array<i64: 128, 128>}, {transform_indices = @transform_1, window_bounds = array<i64: 128, 128>}, {transform_indices = @transform_2, window_bounds = array<i64: 128, 1>}, {pipeline_mode = #tpu.pipeline_mode<synchronous>, transform_indices = @transform_3, window_bounds = array<i64: 1, 128>}, {pipeline_mode = #tpu.pipeline_mode<synchronous>, transform_indices = @transform_4, window_bounds = array<i64: 128, 128>}, {transform_indices = @transform_5, window_bounds = array<i64: 128, 128>}]} {
    %c0_i32 = arith.constant 0 : i32
    %0 = arith.cmpi eq, %arg1, %c0_i32 : i32
    %1 = arith.extui %0 : i1 to i32
    %c0_i32_0 = arith.constant 0 : i32
    %2 = arith.cmpi ne, %1, %c0_i32_0 : i32
    scf.if %2 {
      %cst_10 = arith.constant 0.000000e+00 : f32
      %14 = vector.broadcast %cst_10 : f32 to vector<128x128xf32>
      %c0_11 = arith.constant 0 : index
      %c0_12 = arith.constant 0 : index
      %15 = vector.load %arg8[%c0_11, %c0_12] : memref<128x128xf32, #tpu.memory_space<vmem>>, vector<128x128xf32>
      tpu.vector_store %arg8[%c0_11, %c0_12], %14 {strides = array<i32>} : memref<128x128xf32, #tpu.memory_space<vmem>>, vector<128x128xf32>,
    } else {
    }
    %c0 = arith.constant 0 : index
    %c0_1 = arith.constant 0 : index
    %3 = vector.load %arg2[%c0, %c0_1] : memref<128x128xi8, #tpu.memory_space<vmem>>, vector<128x128xi8>
    %4 = arith.sitofp %3 : vector<128x128xi8> to vector<128x128xf32>
    %5 = arith.truncf %4 : vector<128x128xf32> to vector<128x128xbf16>
    %c0_2 = arith.constant 0 : index
    %c0_3 = arith.constant 0 : index
    %6 = vector.load %arg8[%c0_2, %c0_3] : memref<128x128xf32, #tpu.memory_space<vmem>>, vector<128x128xf32>
    %c0_4 = arith.constant 0 : index
    %c0_5 = arith.constant 0 : index
    %7 = vector.load %arg3[%c0_4, %c0_5] : memref<128x128xbf16, #tpu.memory_space<vmem>>, vector<128x128xbf16>
    %cst = arith.constant dense<0.000000e+00> : vector<128x128xf32>
    %8 = tpu.matmul %5, %7, %cst {dimension_numbers = #tpu.dot_dimension_numbers<[1], [0], [0], [1], [0, 0, 1, 1], [], []>} : vector<128x128xbf16>, vector<128x128xbf16>, vector<128x128xf32> -> vector<128x128xf32>
    %9 = arith.addf %6, %8 : vector<128x128xf32>
    %c0_6 = arith.constant 0 : index
    %c0_7 = arith.constant 0 : index
    %10 = vector.load %arg8[%c0_6, %c0_7] : memref<128x128xf32, #tpu.memory_space<vmem>>, vector<128x128xf32>
    tpu.vector_store %arg8[%c0_6, %c0_7], %9 {strides = array<i32>} : memref<128x128xf32, #tpu.memory_space<vmem>>, vector<128x128xf32>,
    %c0_i32_8 = arith.constant 0 : i32
    %11 = arith.cmpi eq, %arg1, %c0_i32_8 : i32
    %12 = arith.extui %11 : i1 to i32
    %c0_i32_9 = arith.constant 0 : i32
    %13 = arith.cmpi ne, %12, %c0_i32_9 : i32
    scf.if %13 {
      %c0_10 = arith.constant 0 : index
      %c0_11 = arith.constant 0 : index
      %14 = vector.load %arg4[%c0_10, %c0_11] : memref<128x1xf32, #tpu.memory_space<vmem>>, vector<128x1xf32>
      %c0_12 = arith.constant 0 : index
      %c0_13 = arith.constant 0 : index
      %15 = vector.load %arg8[%c0_12, %c0_13] : memref<128x128xf32, #tpu.memory_space<vmem>>, vector<128x128xf32>
      %16 = vector.broadcast %14 : vector<128x1xf32> to vector<128x128xf32>
      %17 = arith.mulf %16, %15 : vector<128x128xf32>
      %c0_14 = arith.constant 0 : index
      %c0_15 = arith.constant 0 : index
      %18 = vector.load %arg5[%c0_14, %c0_15] : memref<1x128xf32, #tpu.memory_space<vmem>>, vector<1x128xf32>
      %19 = vector.broadcast %18 : vector<1x128xf32> to vector<128x128xf32>
      %20 = arith.addf %17, %19 : vector<128x128xf32>
      %cst_16 = arith.constant 0.000000e+00 : f32
      %21 = vector.broadcast %cst_16 : f32 to vector<128x128xf32>
      %22 = arith.maximumf %20, %21 : vector<128x128xf32>
      %23 = arith.truncf %22 : vector<128x128xf32> to vector<128x128xbf16>
      %c0_17 = arith.constant 0 : index
      %c0_18 = arith.constant 0 : index
      %24 = vector.load %arg6[%c0_17, %c0_18] : memref<128x128xbf16, #tpu.memory_space<vmem>>, vector<128x128xbf16>
      %cst_19 = arith.constant dense<0.000000e+00> : vector<128x128xf32>
      %25 = tpu.matmul %23, %24, %cst_19 {dimension_numbers = #tpu.dot_dimension_numbers<[1], [0], [0], [1], [0, 0, 1, 1], [], []>} : vector<128x128xbf16>, vector<128x128xbf16>, vector<128x128xf32> -> vector<128x128xf32>
      %c0_20 = arith.constant 0 : index
      %c0_21 = arith.constant 0 : index
      %26 = vector.load %arg4[%c0_20, %c0_21] : memref<128x1xf32, #tpu.memory_space<vmem>>, vector<128x1xf32>
      %27 = vector.broadcast %26 : vector<128x1xf32> to vector<128x128xf32>
      %28 = arith.mulf %27, %25 : vector<128x128xf32>
      %29 = arith.truncf %28 : vector<128x128xf32> to vector<128x128xbf16>
      %c0_22 = arith.constant 0 : index
      %c0_23 = arith.constant 0 : index
      %30 = vector.load %arg7[%c0_22, %c0_23] : memref<128x128xbf16, #tpu.memory_space<vmem>>, vector<128x128xbf16>
      tpu.vector_store %arg7[%c0_22, %c0_23], %29 {strides = array<i32>} : memref<128x128xbf16, #tpu.memory_space<vmem>>, vector<128x128xbf16>,
    } else {
    }
    return
  }
  func.func @transform_0(%arg0: i32, %arg1: i32) -> (i32, i32) {
    %c0_i32 = arith.constant 0 : i32
    return %arg0, %arg1 : i32, i32
  }
  func.func @transform_1(%arg0: i32, %arg1: i32) -> (i32, i32) {
    %c0_i32 = arith.constant 0 : i32
    %c0_i32_0 = arith.constant 0 : i32
    return %arg1, %c0_i32 : i32, i32
  }
  func.func @transform_2(%arg0: i32, %arg1: i32) -> (i32, i32) {
    %c0_i32 = arith.constant 0 : i32
    %c0_i32_0 = arith.constant 0 : i32
    return %arg0, %c0_i32 : i32, i32
  }
  func.func @transform_3(%arg0: i32, %arg1: i32) -> (i32, i32) {
    %c0_i32 = arith.constant 0 : i32
    %c0_i32_0 = arith.constant 0 : i32
    %c0_i32_1 = arith.constant 0 : i32
    return %c0_i32, %c0_i32_0 : i32, i32
  }
  func.func @transform_4(%arg0: i32, %arg1: i32) -> (i32, i32) {
    %c0_i32 = arith.constant 0 : i32
    %c0_i32_0 = arith.constant 0 : i32
    %c0_i32_1 = arith.constant 0 : i32
    return %c0_i32, %c0_i32_0 : i32, i32
  }
  func.func @transform_5(%arg0: i32, %arg1: i32) -> (i32, i32) {
    %c0_i32 = arith.constant 0 : i32
    %c0_i32_0 = arith.constant 0 : i32
    return %arg0, %c0_i32 : i32, i32
  }
}

module attributes {stable_mosaic.version = 11 : i64} {
  func.func @_gcn_layer_kernel(%arg0: i32, %arg1: i32, %arg2: memref<128x128xi8, #tpu.memory_space<vmem>>, %arg3: memref<128x128xbf16, #tpu.memory_space<vmem>>, %arg4: memref<128x1xf32, #tpu.memory_space<vmem>>, %arg5: memref<1x128xf32, #tpu.memory_space<vmem>>, %arg6: memref<128x128xbf16, #tpu.memory_space<vmem>>, %arg7: memref<128x128xf32, #tpu.memory_space<vmem>>, %arg8: memref<128x128xf32, #tpu.memory_space<vmem>>) attributes {dimension_semantics = [#tpu.dimension_semantics<parallel>, #tpu.dimension_semantics<arbitrary>], iteration_bounds = array<i64: 1, 1>, scalar_prefetch = 0 : i64, scratch_operands = 1 : i64, tpu.core_type = #tpu.core_type<tc>, window_params = [{transform_indices = @transform_0, window_bounds = array<i64: 128, 128>}, {transform_indices = @transform_1, window_bounds = array<i64: 128, 128>}, {transform_indices = @transform_2, window_bounds = array<i64: 128, 1>}, {pipeline_mode = #tpu.pipeline_mode<synchronous>, transform_indices = @transform_3, window_bounds = array<i64: 1, 128>}, {pipeline_mode = #tpu.pipeline_mode<synchronous>, transform_indices = @transform_4, window_bounds = array<i64: 128, 128>}, {transform_indices = @transform_5, window_bounds = array<i64: 128, 128>}]} {
    %c0_i32 = arith.constant 0 : i32
    %0 = arith.cmpi eq, %arg1, %c0_i32 : i32
    %1 = arith.extui %0 : i1 to i32
    %c0_i32_0 = arith.constant 0 : i32
    %2 = arith.cmpi ne, %1, %c0_i32_0 : i32
    scf.if %2 {
      %cst_10 = arith.constant 0.000000e+00 : f32
      %14 = vector.broadcast %cst_10 : f32 to vector<128x128xf32>
      %c0_11 = arith.constant 0 : index
      %c0_12 = arith.constant 0 : index
      %15 = vector.load %arg8[%c0_11, %c0_12] : memref<128x128xf32, #tpu.memory_space<vmem>>, vector<128x128xf32>
      tpu.vector_store %arg8[%c0_11, %c0_12], %14 {strides = array<i32>} : memref<128x128xf32, #tpu.memory_space<vmem>>, vector<128x128xf32>,
    } else {
    }
    %c0 = arith.constant 0 : index
    %c0_1 = arith.constant 0 : index
    %3 = vector.load %arg2[%c0, %c0_1] : memref<128x128xi8, #tpu.memory_space<vmem>>, vector<128x128xi8>
    %4 = arith.sitofp %3 : vector<128x128xi8> to vector<128x128xf32>
    %5 = arith.truncf %4 : vector<128x128xf32> to vector<128x128xbf16>
    %c0_2 = arith.constant 0 : index
    %c0_3 = arith.constant 0 : index
    %6 = vector.load %arg8[%c0_2, %c0_3] : memref<128x128xf32, #tpu.memory_space<vmem>>, vector<128x128xf32>
    %c0_4 = arith.constant 0 : index
    %c0_5 = arith.constant 0 : index
    %7 = vector.load %arg3[%c0_4, %c0_5] : memref<128x128xbf16, #tpu.memory_space<vmem>>, vector<128x128xbf16>
    %cst = arith.constant dense<0.000000e+00> : vector<128x128xf32>
    %8 = tpu.matmul %5, %7, %cst {dimension_numbers = #tpu.dot_dimension_numbers<[1], [0], [0], [1], [0, 0, 1, 1], [], []>} : vector<128x128xbf16>, vector<128x128xbf16>, vector<128x128xf32> -> vector<128x128xf32>
    %9 = arith.addf %6, %8 : vector<128x128xf32>
    %c0_6 = arith.constant 0 : index
    %c0_7 = arith.constant 0 : index
    %10 = vector.load %arg8[%c0_6, %c0_7] : memref<128x128xf32, #tpu.memory_space<vmem>>, vector<128x128xf32>
    tpu.vector_store %arg8[%c0_6, %c0_7], %9 {strides = array<i32>} : memref<128x128xf32, #tpu.memory_space<vmem>>, vector<128x128xf32>,
    %c0_i32_8 = arith.constant 0 : i32
    %11 = arith.cmpi eq, %arg1, %c0_i32_8 : i32
    %12 = arith.extui %11 : i1 to i32
    %c0_i32_9 = arith.constant 0 : i32
    %13 = arith.cmpi ne, %12, %c0_i32_9 : i32
    scf.if %13 {
      %c0_10 = arith.constant 0 : index
      %c0_11 = arith.constant 0 : index
      %14 = vector.load %arg4[%c0_10, %c0_11] : memref<128x1xf32, #tpu.memory_space<vmem>>, vector<128x1xf32>
      %c0_12 = arith.constant 0 : index
      %c0_13 = arith.constant 0 : index
      %15 = vector.load %arg8[%c0_12, %c0_13] : memref<128x128xf32, #tpu.memory_space<vmem>>, vector<128x128xf32>
      %16 = vector.broadcast %14 : vector<128x1xf32> to vector<128x128xf32>
      %17 = arith.mulf %16, %15 : vector<128x128xf32>
      %c0_14 = arith.constant 0 : index
      %c0_15 = arith.constant 0 : index
      %18 = vector.load %arg5[%c0_14, %c0_15] : memref<1x128xf32, #tpu.memory_space<vmem>>, vector<1x128xf32>
      %19 = vector.broadcast %18 : vector<1x128xf32> to vector<128x128xf32>
      %20 = arith.addf %17, %19 : vector<128x128xf32>
      %c0_16 = arith.constant 0 : index
      %c0_17 = arith.constant 0 : index
      %21 = vector.load %arg7[%c0_16, %c0_17] : memref<128x128xf32, #tpu.memory_space<vmem>>, vector<128x128xf32>
      tpu.vector_store %arg7[%c0_16, %c0_17], %20 {strides = array<i32>} : memref<128x128xf32, #tpu.memory_space<vmem>>, vector<128x128xf32>,
    } else {
    }
    return
  }
  func.func @transform_0(%arg0: i32, %arg1: i32) -> (i32, i32) {
    %c0_i32 = arith.constant 0 : i32
    return %arg0, %arg1 : i32, i32
  }
  func.func @transform_1(%arg0: i32, %arg1: i32) -> (i32, i32) {
    %c0_i32 = arith.constant 0 : i32
    %c0_i32_0 = arith.constant 0 : i32
    return %arg1, %c0_i32 : i32, i32
  }
  func.func @transform_2(%arg0: i32, %arg1: i32) -> (i32, i32) {
    %c0_i32 = arith.constant 0 : i32
    %c0_i32_0 = arith.constant 0 : i32
    return %arg0, %c0_i32 : i32, i32
  }
  func.func @transform_3(%arg0: i32, %arg1: i32) -> (i32, i32) {
    %c0_i32 = arith.constant 0 : i32
    %c0_i32_0 = arith.constant 0 : i32
    %c0_i32_1 = arith.constant 0 : i32
    return %c0_i32, %c0_i32_0 : i32, i32
  }
  func.func @transform_4(%arg0: i32, %arg1: i32) -> (i32, i32) {
    %c0_i32 = arith.constant 0 : i32
    %c0_i32_0 = arith.constant 0 : i32
    %c0_i32_1 = arith.constant 0 : i32
    return %c0_i32, %c0_i32_0 : i32, i32
  }
  func.func @transform_5(%arg0: i32, %arg1: i32) -> (i32, i32) {
    %c0_i32 = arith.constant 0 : i32
    %c0_i32_0 = arith.constant 0 : i32
    return %arg0, %c0_i32 : i32, i32
  }
}

</mosaic_0001>

<llo_original>
// kernel: gcn_forward.2
$region0: #{gcn_forward.2}
  #allocation0 [shape = 'u32[]', space=smem, size = 0x4, offset = 0x4, fixed_abs, tag = 'smem constant byte address 0x4 - core index']
  #allocation1 [shape = 'u32[144,128]{1,0:T(1,128)}', space=vmem, size = 0x12000, scoped, tag = 'internal scratch']
  #allocation2 [shape = 'f32[128,128]{1,0:T(8,128)}', space=vmem, size = 0x10000, scoped, tag = 'scratch operand']
  %s0 = inlined_call_operand.vmem [shape: s8[128,128], index: 0, kind: input, shape index: {}]
  %s1 = inlined_call_operand.vmem [shape: bf16[128,128], index: 1, kind: input, shape index: {}]
  %s2 = inlined_call_operand.vmem [shape: f32[128,1], index: 2, kind: input, shape index: {}]
  %s3 = inlined_call_operand.vmem [shape: f32[1,128], index: 3, kind: input, shape index: {}]
  %s4 = inlined_call_operand.vmem [shape: bf16[128,128], index: 4, kind: input, shape index: {}]
  %s5 = inlined_call_operand.vmem [shape: bf16[128,128], index: 5, kind: output, shape index: {}]
  %s6 = sld [smem:[#allocation0]]
  $region38: #{gcn_forward.2} parent=0
    _
  %s8 = ssub.s32 1, %s6
  %s9 = scalar_select 0, %s8, %s6
  // Predicated region
  $region2: #{gcn_forward.2} parent=0 // pred_check
    _
  $region3: #{gcn_forward.2} parent=0 // pred_check_branch
    %11 = sbr.rel (0) target = $region5
  $region4: #{gcn_forward.2} parent=0 // pred_region
    _
  $region5: #{gcn_forward.2} parent=0 // pred_fallthru
    _
  // Predicated region
  $region6: #{gcn_forward.2} parent=0 // pred_check
    _
  $region7: #{gcn_forward.2} parent=0 // pred_check_branch
    %13 = sbr.rel (0) target = $region9
  $region8: #{gcn_forward.2} parent=0 // pred_region
    _
  $region9: #{gcn_forward.2} parent=0 // pred_fallthru
    _
  // Predicated region
  $region10: #{gcn_forward.2} parent=0 // pred_check
    _
  $region11: #{gcn_forward.2} parent=0 // pred_check_branch
    %15 = sbr.rel (0) target = $region13
  $region12: #{gcn_forward.2} parent=0 // pred_region
    _
  $region13: #{gcn_forward.2} parent=0 // pred_fallthru
    _
  // Predicated region
  $region14: #{gcn_forward.2} parent=0 // pred_check
    _
  $region15: #{gcn_forward.2} parent=0 // pred_check_branch
    %17 = sbr.rel (0) target = $region17
  $region16: #{gcn_forward.2} parent=0 // pred_region
    _
  $region17: #{gcn_forward.2} parent=0 // pred_fallthru
    _
  // Predicated region
  $region18: #{gcn_forward.2} parent=0 // pred_check
    _
  $region19: #{gcn_forward.2} parent=0 // pred_check_branch
    %19 = sbr.rel (0) target = $region21
  $region20: #{gcn_forward.2} parent=0 // pred_region
    _
  $region21: #{gcn_forward.2} parent=0 // pred_fallthru
    _
  %p21 = scmp.eq.s32.totalorder 0, 0
  // Predicated region
  $region22: #{gcn_forward.2} parent=0 // pred_check
    %p22 = pneg %p21
  $region23: #{gcn_forward.2} parent=0 // pred_check_branch
    %24 = sbr.rel (%p22) target = $region25
  $region24: #{gcn_forward.2} parent=0 // pred_region
    %25 = vst [vmem:[#allocation2] sm:$0xff] 0.0
    %26 = vst [vmem:[#allocation2 + $0x8] sm:$0xff] 0.0
    %27 = vst [vmem:[#allocation2 + $0x10] sm:$0xff] 0.0
    %28 = vst [vmem:[#allocation2 + $0x18] sm:$0xff] 0.0
    %29 = vst [vmem:[#allocation2 + $0x20] sm:$0xff] 0.0
    %30 = vst [vmem:[#allocation2 + $0x28] sm:$0xff] 0.0
    %31 = vst [vmem:[#allocation2 + $0x30] sm:$0xff] 0.0
    %32 = vst [vmem:[#allocation2 + $0x38] sm:$0xff] 0.0
    %33 = vst [vmem:[#allocation2 + $0x40] sm:$0xff] 0.0
    %34 = vst [vmem:[#allocation2 + $0x48] sm:$0xff] 0.0
    %35 = vst [vmem:[#allocation2 + $0x50] sm:$0xff] 0.0
    %36 = vst [vmem:[#allocation2 + $0x58] sm:$0xff] 0.0
    %37 = vst [vmem:[#allocation2 + $0x60] sm:$0xff] 0.0
    %38 = vst [vmem:[#allocation2 + $0x68] sm:$0xff] 0.0
    %39 = vst [vmem:[#allocation2 + $0x70] sm:$0xff] 0.0
    %40 = vst [vmem:[#allocation2 + $0x78] sm:$0xff] 0.0
  $region25: #{gcn_forward.2} parent=0 // pred_fallthru
    _
  %v41 = vld [vmem:[%s0] sm:$0x3]
  %v42 = vld [vmem:[%s0 + $0x2] sm:$0x3]
  %v43 = vld [vmem:[%s0 + $0x4] sm:$0x3]
  %v44 = vld [vmem:[%s0 + $0x6] sm:$0x3]
  %v45 = vld [vmem:[%s0 + $0x8] sm:$0x3]
  %v46 = vld [vmem:[%s0 + $0xa] sm:$0x3]
  %v47 = vld [vmem:[%s0 + $0xc] sm:$0x3]
  %v48 = vld [vmem:[%s0 + $0xe] sm:$0x3]
  %v49 = vld [vmem:[%s0 + $0x10] sm:$0x3]
  %v50 = vld [vmem:[%s0 + $0x12] sm:$0x3]
  %v51 = vld [vmem:[%s0 + $0x14] sm:$0x3]
  %v52 = vld [vmem:[%s0 + $0x16] sm:$0x3]
  %v53 = vld [vmem:[%s0 + $0x18] sm:$0x3]
  %v54 = vld [vmem:[%s0 + $0x1a] sm:$0x3]
  %v55 = vld [vmem:[%s0 + $0x1c] sm:$0x3]
  %v56 = vld [vmem:[%s0 + $0x1e] sm:$0x3]
  %v57 = vunpack.c.l.s8.bf16 %v41
  %v58 = vunpack.c.l.s8.bf16 %v42
  %v59 = vunpack.c.l.s8.bf16 %v43
  %v60 = vunpack.c.l.s8.bf16 %v44
  %v61 = vunpack.c.l.s8.bf16 %v45
  %v62 = vunpack.c.l.s8.bf16 %v46
  %v63 = vunpack.c.l.s8.bf16 %v47
  %v64 = vunpack.c.l.s8.bf16 %v48
  %v65 = vunpack.c.l.s8.bf16 %v49
  %v66 = vunpack.c.l.s8.bf16 %v50
  %v67 = vunpack.c.l.s8.bf16 %v51
  %v68 = vunpack.c.l.s8.bf16 %v52
  %v69 = vunpack.c.l.s8.bf16 %v53
  %v70 = vunpack.c.l.s8.bf16 %v54
  %v71 = vunpack.c.l.s8.bf16 %v55
  %v72 = vunpack.c.l.s8.bf16 %v56
  %v73 = vld [vmem:[#allocation2] sm:$0xff]
  %v74 = vld [vmem:[#allocation2 + $0x8] sm:$0xff]
  %v75 = vld [vmem:[#allocation2 + $0x10] sm:$0xff]
  %v76 = vld [vmem:[#allocation2 + $0x18] sm:$0xff]
  %v77 = vld [vmem:[#allocation2 + $0x20] sm:$0xff]
  %v78 = vld [vmem:[#allocation2 + $0x28] sm:$0xff]
  %v79 = vld [vmem:[#allocation2 + $0x30] sm:$0xff]
  %v80 = vld [vmem:[#allocation2 + $0x38] sm:$0xff]
  %v81 = vld [vmem:[#allocation2 + $0x40] sm:$0xff]
  %v82 = vld [vmem:[#allocation2 + $0x48] sm:$0xff]
  %v83 = vld [vmem:[#allocation2 + $0x50] sm:$0xff]
  %v84 = vld [vmem:[#allocation2 + $0x58] sm:$0xff]
  %v85 = vld [vmem:[#allocation2 + $0x60] sm:$0xff]
  %v86 = vld [vmem:[#allocation2 + $0x68] sm:$0xff]
  %v87 = vld [vmem:[#allocation2 + $0x70] sm:$0xff]
  %v88 = vld [vmem:[#allocation2 + $0x78] sm:$0xff]
  %v89 = vld [vmem:[%s1] sm:$0xf]
  %v90 = vld [vmem:[%s1 + $0x4] sm:$0xf]
  %v91 = vld [vmem:[%s1 + $0x8] sm:$0xf]
  %v92 = vld [vmem:[%s1 + $0xc] sm:$0xf]
  %v93 = vld [vmem:[%s1 + $0x10] sm:$0xf]
  %v94 = vld [vmem:[%s1 + $0x14] sm:$0xf]
  %v95 = vld [vmem:[%s1 + $0x18] sm:$0xf]
  %v96 = vld [vmem:[%s1 + $0x1c] sm:$0xf]
  %v97 = vld [vmem:[%s1 + $0x20] sm:$0xf]
  %v98 = vld [vmem:[%s1 + $0x24] sm:$0xf]
  %v99 = vld [vmem:[%s1 + $0x28] sm:$0xf]
  %v100 = vld [vmem:[%s1 + $0x2c] sm:$0xf]
  %v101 = vld [vmem:[%s1 + $0x30] sm:$0xf]
  %v102 = vld [vmem:[%s1 + $0x34] sm:$0xf]
  %v103 = vld [vmem:[%s1 + $0x38] sm:$0xf]
  %v104 = vld [vmem:[%s1 + $0x3c] sm:$0xf]
  %v121 = vunpack.c.l.b16 %v57
  %v122 = vunpack.c.l.b16 %v58
  %v123 = vunpack.c.l.b16 %v59
  %v124 = vunpack.c.l.b16 %v60
  %v125 = vunpack.c.l.b16 %v61
  %v126 = vunpack.c.l.b16 %v62
  %v127 = vunpack.c.l.b16 %v63
  %v128 = vunpack.c.l.b16 %v64
  %v129 = vunpack.c.l.b16 %v65
  %v130 = vunpack.c.l.b16 %v66
  %v131 = vunpack.c.l.b16 %v67
  %v132 = vunpack.c.l.b16 %v68
  %v133 = vunpack.c.l.b16 %v69
  %v134 = vunpack.c.l.b16 %v70
  %v135 = vunpack.c.l.b16 %v71
  %v136 = vunpack.c.l.b16 %v72
  %v137 = vpack.c.b16 %v122, %v121
  %v138 = vpack.c.b16 %v124, %v123
  %v139 = vpack.c.b16 %v126, %v125
  %v140 = vpack.c.b16 %v128, %v127
  %v141 = vpack.c.b16 %v130, %v129
  %v142 = vpack.c.b16 %v132, %v131
  %v143 = vpack.c.b16 %v134, %v133
  %v144 = vpack.c.b16 %v136, %v135
  %v169 = vunpack.c.l.b16 %v89
  %v170 = vunpack.c.l.b16 %v90
  %v171 = vunpack.c.l.b16 %v91
  %v172 = vunpack.c.l.b16 %v92
  %v173 = vunpack.c.l.b16 %v93
  %v174 = vunpack.c.l.b16 %v94
  %v175 = vunpack.c.l.b16 %v95
  %v176 = vunpack.c.l.b16 %v96
  %v177 = vunpack.c.l.b16 %v97
  %v178 = vunpack.c.l.b16 %v98
  %v179 = vunpack.c.l.b16 %v99
  %v180 = vunpack.c.l.b16 %v100
  %v181 = vunpack.c.l.b16 %v101
  %v182 = vunpack.c.l.b16 %v102
  %v183 = vunpack.c.l.b16 %v103
  %v184 = vunpack.c.l.b16 %v104
  %v185 = vpack.c.b16 %v170, %v169
  %v186 = vpack.c.b16 %v172, %v171
  %v187 = vpack.c.b16 %v174, %v173
  %v188 = vpack.c.b16 %v176, %v175
  %v189 = vpack.c.b16 %v178, %v177
  %v190 = vpack.c.b16 %v180, %v179
  %v191 = vpack.c.b16 %v182, %v181
  %v192 = vpack.c.b16 %v184, %v183
  %201 = vmatprep.subr.bf16.mxu0 0
  %202 = vmatpush1.bf16.msra.mxu0 %v185
  %203 = vmatprep.subr.bf16.mxu0 0
  %204 = vmatpush1.bf16.msra.mxu0 %v186
  %205 = vmatprep.subr.bf16.mxu0 0
  %206 = vmatpush1.bf16.msra.mxu0 %v187
  %207 = vmatprep.subr.bf16.mxu0 0
  %208 = vmatpush1.bf16.msra.mxu0 %v188
  %209 = vmatprep.subr.bf16.mxu0 0
  %210 = vmatpush1.bf16.msra.mxu0 %v189
  %211 = vmatprep.subr.bf16.mxu0 0
  %212 = vmatpush1.bf16.msra.mxu0 %v190
  %213 = vmatprep.subr.bf16.mxu0 0
  %214 = vmatpush1.bf16.msra.mxu0 %v191
  %215 = vmatprep.subr.bf16.mxu0 0
  %216 = vmatpush1.bf16.msra.mxu0 %v192
  %217 = vmatprep.subr.bf16.mxu0 0
  %218 = vmatpush1.bf16.msra.mxu0 0
  %219 = vmatprep.subr.bf16.mxu0 0
  %220 = vmatpush1.bf16.msra.mxu0 0
  %221 = vmatprep.subr.bf16.mxu0 0
  %222 = vmatpush1.bf16.msra.mxu0 0
  %223 = vmatprep.subr.bf16.mxu0 0
  %224 = vmatpush1.bf16.msra.mxu0 0
  %225 = vmatprep.subr.bf16.mxu0 0
  %226 = vmatpush1.bf16.msra.mxu0 0
  %227 = vmatprep.subr.bf16.mxu0 0
  %228 = vmatpush1.bf16.msra.mxu0 0
  %229 = vmatprep.subr.bf16.mxu0 0
  %230 = vmatpush1.bf16.msra.mxu0 0
  %231 = vmatprep.subr.bf16.mxu0 0
  %232 = vmatpush1.bf16.msra.mxu0 0
  %233 = vmatprep.mubr.bf16.mxu0 0
  %234 = vmatmul.mubr.bf16.gmra.mrb[0].mxu0 %v137
  %v235 = vpop.f32.mrb[0].mxu0
  %v236 = vadd.f32 0.0, %v235
  %v237 = vpop.f32.mrb[0].mxu0
  %v238 = vpop.f32.mrb[0].mxu0
  %v239 = vadd.f32 0.0, %v238
  %v240 = vpop.f32.mrb[0].mxu0
  %241 = vmatprep.mubr.bf16.mxu0 0
  %242 = vmatmul.mubr.bf16.gmra.mrb[0].mxu0 %v138
  %v243 = vpop.f32.mrb[0].mxu0
  %v244 = vadd.f32 0.0, %v243
  %v245 = vpop.f32.mrb[0].mxu0
  %v246 = vpop.f32.mrb[0].mxu0
  %v247 = vadd.f32 0.0, %v246
  %v248 = vpop.f32.mrb[0].mxu0
  %249 = vmatprep.mubr.bf16.mxu0 0
  %250 = vmatmul.mubr.bf16.gmra.mrb[0].mxu0 %v139
  %v251 = vpop.f32.mrb[0].mxu0
  %v252 = vadd.f32 0.0, %v251
  %v253 = vpop.f32.mrb[0].mxu0
  %v254 = vpop.f32.mrb[0].mxu0
  %v255 = vadd.f32 0.0, %v254
  %v256 = vpop.f32.mrb[0].mxu0
  %257 = vmatprep.mubr.bf16.mxu0 0
  %258 = vmatmul.mubr.bf16.gmra.mrb[0].mxu0 %v140
  %v259 = vpop.f32.mrb[0].mxu0
  %v260 = vadd.f32 0.0, %v259
  %v261 = vpop.f32.mrb[0].mxu0
  %v262 = vpop.f32.mrb[0].mxu0
  %v263 = vadd.f32 0.0, %v262
  %v264 = vpop.f32.mrb[0].mxu0
  %265 = vmatprep.mubr.bf16.mxu0 0
  %266 = vmatmul.mubr.bf16.gmra.mrb[0].mxu0 %v141
  %v267 = vpop.f32.mrb[0].mxu0
  %v268 = vadd.f32 0.0, %v267
  %v269 = vpop.f32.mrb[0].mxu0
  %v270 = vpop.f32.mrb[0].mxu0
  %v271 = vadd.f32 0.0, %v270
  %v272 = vpop.f32.mrb[0].mxu0
  %273 = vmatprep.mubr.bf16.mxu0 0
  %274 = vmatmul.mubr.bf16.gmra.mrb[0].mxu0 %v142
  %v275 = vpop.f32.mrb[0].mxu0
  %v276 = vadd.f32 0.0, %v275
  %v277 = vpop.f32.mrb[0].mxu0
  %v278 = vpop.f32.mrb[0].mxu0
  %v279 = vadd.f32 0.0, %v278
  %v280 = vpop.f32.mrb[0].mxu0
  %281 = vmatprep.mubr.bf16.mxu0 0
  %282 = vmatmul.mubr.bf16.gmra.mrb[0].mxu0 %v143
  %v283 = vpop.f32.mrb[0].mxu0
  %v284 = vadd.f32 0.0, %v283
  %v285 = vpop.f32.mrb[0].mxu0
  %v286 = vpop.f32.mrb[0].mxu0
  %v287 = vadd.f32 0.0, %v286
  %v288 = vpop.f32.mrb[0].mxu0
  %289 = vmatprep.mubr.bf16.mxu0 0
  %290 = vmatmul.mubr.bf16.gmra.mrb[0].mxu0 %v144
  %v291 = vpop.f32.mrb[0].mxu0
  %v292 = vadd.f32 0.0, %v291
  %v293 = vpop.f32.mrb[0].mxu0
  %v294 = vpop.f32.mrb[0].mxu0
  %v295 = vadd.f32 0.0, %v294
  %v296 = vpop.f32.mrb[0].mxu0
  %297 = vdwg.mxu0
  %v298 = vadd.f32 %v73, %v236
  %v299 = vadd.f32 %v74, %v239
  %v300 = vadd.f32 %v75, %v244
  %v301 = vadd.f32 %v76, %v247
  %v302 = vadd.f32 %v77, %v252
  %v303 = vadd.f32 %v78, %v255
  %v304 = vadd.f32 %v79, %v260
  %v305 = vadd.f32 %v80, %v263
  %v306 = vadd.f32 %v81, %v268
  %v307 = vadd.f32 %v82, %v271
  %v308 = vadd.f32 %v83, %v276
  %v309 = vadd.f32 %v84, %v279
  %v310 = vadd.f32 %v85, %v284
  %v311 = vadd.f32 %v86, %v287
  %v312 = vadd.f32 %v87, %v292
  %v313 = vadd.f32 %v88, %v295
  %314 = vst [vmem:[#allocation2] sm:$0xff] %v298
  %315 = vst [vmem:[#allocation2 + $0x8] sm:$0xff] %v299
  %316 = vst [vmem:[#allocation2 + $0x10] sm:$0xff] %v300
  %317 = vst [vmem:[#allocation2 + $0x18] sm:$0xff] %v301
  %318 = vst [vmem:[#allocation2 + $0x20] sm:$0xff] %v302
  %319 = vst [vmem:[#allocation2 + $0x28] sm:$0xff] %v303
  %320 = vst [vmem:[#allocation2 + $0x30] sm:$0xff] %v304
  %321 = vst [vmem:[#allocation2 + $0x38] sm:$0xff] %v305
  %322 = vst [vmem:[#allocation2 + $0x40] sm:$0xff] %v306
  %323 = vst [vmem:[#allocation2 + $0x48] sm:$0xff] %v307
  %324 = vst [vmem:[#allocation2 + $0x50] sm:$0xff] %v308
  %325 = vst [vmem:[#allocation2 + $0x58] sm:$0xff] %v309
  %326 = vst [vmem:[#allocation2 + $0x60] sm:$0xff] %v310
  %327 = vst [vmem:[#allocation2 + $0x68] sm:$0xff] %v311
  %328 = vst [vmem:[#allocation2 + $0x70] sm:$0xff] %v312
  %329 = vst [vmem:[#allocation2 + $0x78] sm:$0xff] %v313
  // Predicated region
  $region26: #{gcn_forward.2} parent=0 // pred_check
    %p330 = pneg %p21
  $region27: #{gcn_forward.2} parent=0 // pred_check_branch
    %332 = sbr.rel (%p330) target = $region29
  $region28: #{gcn_forward.2} parent=0 // pred_region
    %v333 = vld [vmem:[%s2] sm:$0xff]
    %v334 = vld [vmem:[%s2 + $0x8] sm:$0xff]
    %v335 = vld [vmem:[%s2 + $0x10] sm:$0xff]
    %v336 = vld [vmem:[%s2 + $0x18] sm:$0xff]
    %v337 = vld [vmem:[%s2 + $0x20] sm:$0xff]
    %v338 = vld [vmem:[%s2 + $0x28] sm:$0xff]
    %v339 = vld [vmem:[%s2 + $0x30] sm:$0xff]
    %v340 = vld [vmem:[%s2 + $0x38] sm:$0xff]
    %v341 = vld [vmem:[%s2 + $0x40] sm:$0xff]
    %v342 = vld [vmem:[%s2 + $0x48] sm:$0xff]
    %v343 = vld [vmem:[%s2 + $0x50] sm:$0xff]
    %v344 = vld [vmem:[%s2 + $0x58] sm:$0xff]
    %v345 = vld [vmem:[%s2 + $0x60] sm:$0xff]
    %v346 = vld [vmem:[%s2 + $0x68] sm:$0xff]
    %v347 = vld [vmem:[%s2 + $0x70] sm:$0xff]
    %v348 = vld [vmem:[%s2 + $0x78] sm:$0xff]
    %v349 = vld [vmem:[#allocation2] sm:$0xff]
    %v350 = vld [vmem:[#allocation2 + $0x8] sm:$0xff]
    %v351 = vld [vmem:[#allocation2 + $0x10] sm:$0xff]
    %v352 = vld [vmem:[#allocation2 + $0x18] sm:$0xff]
    %v353 = vld [vmem:[#allocation2 + $0x20] sm:$0xff]
    %v354 = vld [vmem:[#allocation2 + $0x28] sm:$0xff]
    %v355 = vld [vmem:[#allocation2 + $0x30] sm:$0xff]
    %v356 = vld [vmem:[#allocation2 + $0x38] sm:$0xff]
    %v357 = vld [vmem:[#allocation2 + $0x40] sm:$0xff]
    %v358 = vld [vmem:[#allocation2 + $0x48] sm:$0xff]
    %v359 = vld [vmem:[#allocation2 + $0x50] sm:$0xff]
    %v360 = vld [vmem:[#allocation2 + $0x58] sm:$0xff]
    %v361 = vld [vmem:[#allocation2 + $0x60] sm:$0xff]
    %v362 = vld [vmem:[#allocation2 + $0x68] sm:$0xff]
    %v363 = vld [vmem:[#allocation2 + $0x70] sm:$0xff]
    %v364 = vld [vmem:[#allocation2 + $0x78] sm:$0xff]
    %366 = vset.pattern.permute.xlu0 0
    %367 = vperm.xlu0 %366, %v333
    %v368 = vpop.permute.xlu0 %367
    %371 = vset.pattern.permute.xlu0 0
    %372 = vperm.xlu0 %371, %v334
    %v373 = vpop.permute.xlu0 %372
    %376 = vset.pattern.permute.xlu0 0
    %377 = vperm.xlu0 %376, %v335
    %v378 = vpop.permute.xlu0 %377
    %381 = vset.pattern.permute.xlu0 0
    %382 = vperm.xlu0 %381, %v336
    %v383 = vpop.permute.xlu0 %382
    %386 = vset.pattern.permute.xlu0 0
    %387 = vperm.xlu0 %386, %v337
    %v388 = vpop.permute.xlu0 %387
    %391 = vset.pattern.permute.xlu0 0
    %392 = vperm.xlu0 %391, %v338
    %v393 = vpop.permute.xlu0 %392
    %396 = vset.pattern.permute.xlu0 0
    %397 = vperm.xlu0 %396, %v339
    %v398 = vpop.permute.xlu0 %397
    %401 = vset.pattern.permute.xlu0 0
    %402 = vperm.xlu0 %401, %v340
    %v403 = vpop.permute.xlu0 %402
    %406 = vset.pattern.permute.xlu0 0
    %407 = vperm.xlu0 %406, %v341
    %v408 = vpop.permute.xlu0 %407
    %411 = vset.pattern.permute.xlu0 0
    %412 = vperm.xlu0 %411, %v342
    %v413 = vpop.permute.xlu0 %412
    %416 = vset.pattern.permute.xlu0 0
    %417 = vperm.xlu0 %416, %v343
    %v418 = vpop.permute.xlu0 %417
    %421 = vset.pattern.permute.xlu0 0
    %422 = vperm.xlu0 %421, %v344
    %v423 = vpop.permute.xlu0 %422
    %426 = vset.pattern.permute.xlu0 0
    %427 = vperm.xlu0 %426, %v345
    %v428 = vpop.permute.xlu0 %427
    %431 = vset.pattern.permute.xlu0 0
    %432 = vperm.xlu0 %431, %v346
    %v433 = vpop.permute.xlu0 %432
    %436 = vset.pattern.permute.xlu0 0
    %437 = vperm.xlu0 %436, %v347
    %v438 = vpop.permute.xlu0 %437
    %441 = vset.pattern.permute.xlu0 0
    %442 = vperm.xlu0 %441, %v348
    %v443 = vpop.permute.xlu0 %442
    %v445 = vmul.f32 %v368, %v349
    %v446 = vmul.f32 %v373, %v350
    %v447 = vmul.f32 %v378, %v351
    %v448 = vmul.f32 %v383, %v352
    %v449 = vmul.f32 %v388, %v353
    %v450 = vmul.f32 %v393, %v354
    %v451 = vmul.f32 %v398, %v355
    %v452 = vmul.f32 %v403, %v356
    %v453 = vmul.f32 %v408, %v357
    %v454 = vmul.f32 %v413, %v358
    %v455 = vmul.f32 %v418, %v359
    %v456 = vmul.f32 %v423, %v360
    %v457 = vmul.f32 %v428, %v361
    %v458 = vmul.f32 %v433, %v362
    %v459 = vmul.f32 %v438, %v363
    %v460 = vmul.f32 %v443, %v364
    %v461 = vld [vmem:[%s3] sm:$0x1]
    %v463 = vlaneseq
    %v464 = vshrl.u32 %v463, 7
    %v465 = vsub.s32 0, %v464
    %v466 = vrot.slane %v461, %v465
    %v468 = vadd.f32 %v445, %v466
    %v469 = vadd.f32 %v446, %v466
    %v470 = vadd.f32 %v447, %v466
    %v471 = vadd.f32 %v448, %v466
    %v472 = vadd.f32 %v449, %v466
    %v473 = vadd.f32 %v450, %v466
    %v474 = vadd.f32 %v451, %v466
    %v475 = vadd.f32 %v452, %v466
    %v476 = vadd.f32 %v453, %v466
    %v477 = vadd.f32 %v454, %v466
    %v478 = vadd.f32 %v455, %v466
    %v479 = vadd.f32 %v456, %v466
    %v480 = vadd.f32 %v457, %v466
    %v481 = vadd.f32 %v458, %v466
    %v482 = vadd.f32 %v459, %v466
    %v483 = vadd.f32 %v460, %v466
    %v484 = vmax.f32 %v468, 0.0
    %v485 = vmax.f32 %v469, 0.0
    %v486 = vmax.f32 %v470, 0.0
    %v487 = vmax.f32 %v471, 0.0
    %v488 = vmax.f32 %v472, 0.0
    %v489 = vmax.f32 %v473, 0.0
    %v490 = vmax.f32 %v474, 0.0
    %v491 = vmax.f32 %v475, 0.0
    %v492 = vmax.f32 %v476, 0.0
    %v493 = vmax.f32 %v477, 0.0
    %v494 = vmax.f32 %v478, 0.0
    %v495 = vmax.f32 %v479, 0.0
    %v496 = vmax.f32 %v480, 0.0
    %v497 = vmax.f32 %v481, 0.0
    %v498 = vmax.f32 %v482, 0.0
    %v499 = vmax.f32 %v483, 0.0
    %v500 = vpack.c.bf16 %v485, %v484
    %v501 = vpack.c.bf16 %v487, %v486
    %v502 = vpack.c.bf16 %v489, %v488
    %v503 = vpack.c.bf16 %v491, %v490
    %v504 = vpack.c.bf16 %v493, %v492
    %v505 = vpack.c.bf16 %v495, %v494
    %v506 = vpack.c.bf16 %v497, %v496
    %v507 = vpack.c.bf16 %v499, %v498
    %v508 = vld [vmem:[%s4] sm:$0xf]
    %v509 = vld [vmem:[%s4 + $0x4] sm:$0xf]
    %v510 = vld [vmem:[%s4 + $0x8] sm:$0xf]
    %v511 = vld [vmem:[%s4 + $0xc] sm:$0xf]
    %v512 = vld [vmem:[%s4 + $0x10] sm:$0xf]
    %v513 = vld [vmem:[%s4 + $0x14] sm:$0xf]
    %v514 = vld [vmem:[%s4 + $0x18] sm:$0xf]
    %v515 = vld [vmem:[%s4 + $0x1c] sm:$0xf]
    %v516 = vld [vmem:[%s4 + $0x20] sm:$0xf]
    %v517 = vld [vmem:[%s4 + $0x24] sm:$0xf]
    %v518 = vld [vmem:[%s4 + $0x28] sm:$0xf]
    %v519 = vld [vmem:[%s4 + $0x2c] sm:$0xf]
    %v520 = vld [vmem:[%s4 + $0x30] sm:$0xf]
    %v521 = vld [vmem:[%s4 + $0x34] sm:$0xf]
    %v522 = vld [vmem:[%s4 + $0x38] sm:$0xf]
    %v523 = vld [vmem:[%s4 + $0x3c] sm:$0xf]
    %v540 = vunpack.c.l.b16 %v508
    %v541 = vunpack.c.l.b16 %v509
    %v542 = vunpack.c.l.b16 %v510
    %v543 = vunpack.c.l.b16 %v511
    %v544 = vunpack.c.l.b16 %v512
    %v545 = vunpack.c.l.b16 %v513
    %v546 = vunpack.c.l.b16 %v514
    %v547 = vunpack.c.l.b16 %v515
    %v548 = vunpack.c.l.b16 %v516
    %v549 = vunpack.c.l.b16 %v517
    %v550 = vunpack.c.l.b16 %v518
    %v551 = vunpack.c.l.b16 %v519
    %v552 = vunpack.c.l.b16 %v520
    %v553 = vunpack.c.l.b16 %v521
    %v554 = vunpack.c.l.b16 %v522
    %v555 = vunpack.c.l.b16 %v523
    %v556 = vpack.c.b16 %v541, %v540
    %v557 = vpack.c.b16 %v543, %v542
    %v558 = vpack.c.b16 %v545, %v544
    %v559 = vpack.c.b16 %v547, %v546
    %v560 = vpack.c.b16 %v549, %v548
    %v561 = vpack.c.b16 %v551, %v550
    %v562 = vpack.c.b16 %v553, %v552
    %v563 = vpack.c.b16 %v555, %v554
    %572 = vmatprep.subr.bf16.mxu0 0
    %573 = vmatpush1.bf16.msra.mxu0 %v556
    %574 = vmatprep.subr.bf16.mxu0 0
    %575 = vmatpush1.bf16.msra.mxu0 %v557
    %576 = vmatprep.subr.bf16.mxu0 0
    %577 = vmatpush1.bf16.msra.mxu0 %v558
    %578 = vmatprep.subr.bf16.mxu0 0
    %579 = vmatpush1.bf16.msra.mxu0 %v559
    %580 = vmatprep.subr.bf16.mxu0 0
    %581 = vmatpush1.bf16.msra.mxu0 %v560
    %582 = vmatprep.subr.bf16.mxu0 0
    %583 = vmatpush1.bf16.msra.mxu0 %v561
    %584 = vmatprep.subr.bf16.mxu0 0
    %585 = vmatpush1.bf16.msra.mxu0 %v562
    %586 = vmatprep.subr.bf16.mxu0 0
    %587 = vmatpush1.bf16.msra.mxu0 %v563
    %588 = vmatprep.subr.bf16.mxu0 0
    %589 = vmatpush1.bf16.msra.mxu0 0
    %590 = vmatprep.subr.bf16.mxu0 0
    %591 = vmatpush1.bf16.msra.mxu0 0
    %592 = vmatprep.subr.bf16.mxu0 0
    %593 = vmatpush1.bf16.msra.mxu0 0
    %594 = vmatprep.subr.bf16.mxu0 0
    %595 = vmatpush1.bf16.msra.mxu0 0
    %596 = vmatprep.subr.bf16.mxu0 0
    %597 = vmatpush1.bf16.msra.mxu0 0
    %598 = vmatprep.subr.bf16.mxu0 0
    %599 = vmatpush1.bf16.msra.mxu0 0
    %600 = vmatprep.subr.bf16.mxu0 0
    %601 = vmatpush1.bf16.msra.mxu0 0
    %602 = vmatprep.subr.bf16.mxu0 0
    %603 = vmatpush1.bf16.msra.mxu0 0
    %604 = vmatprep.mubr.bf16.mxu0 0
    %605 = vmatmul.mubr.bf16.gmra.mrb[0].mxu0 %v500
    %v606 = vpop.f32.mrb[0].mxu0
    %v607 = vadd.f32 0.0, %v606
    %v608 = vpop.f32.mrb[0].mxu0
    %v609 = vpop.f32.mrb[0].mxu0
    %v610 = vadd.f32 0.0, %v609
    %v611 = vpop.f32.mrb[0].mxu0
    %612 = vmatprep.mubr.bf16.mxu0 0
    %613 = vmatmul.mubr.bf16.gmra.mrb[0].mxu0 %v501
    %v614 = vpop.f32.mrb[0].mxu0
    %v615 = vadd.f32 0.0, %v614
    %v616 = vpop.f32.mrb[0].mxu0
    %v617 = vpop.f32.mrb[0].mxu0
    %v618 = vadd.f32 0.0, %v617
    %v619 = vpop.f32.mrb[0].mxu0
    %620 = vmatprep.mubr.bf16.mxu0 0
    %621 = vmatmul.mubr.bf16.gmra.mrb[0].mxu0 %v502
    %v622 = vpop.f32.mrb[0].mxu0
    %v623 = vadd.f32 0.0, %v622
    %v624 = vpop.f32.mrb[0].mxu0
    %v625 = vpop.f32.mrb[0].mxu0
    %v626 = vadd.f32 0.0, %v625
    %v627 = vpop.f32.mrb[0].mxu0
    %628 = vmatprep.mubr.bf16.mxu0 0
    %629 = vmatmul.mubr.bf16.gmra.mrb[0].mxu0 %v503
    %v630 = vpop.f32.mrb[0].mxu0
    %v631 = vadd.f32 0.0, %v630
    %v632 = vpop.f32.mrb[0].mxu0
    %v633 = vpop.f32.mrb[0].mxu0
    %v634 = vadd.f32 0.0, %v633
    %v635 = vpop.f32.mrb[0].mxu0
    %636 = vmatprep.mubr.bf16.mxu0 0
    %637 = vmatmul.mubr.bf16.gmra.mrb[0].mxu0 %v504
    %v638 = vpop.f32.mrb[0].mxu0
    %v639 = vadd.f32 0.0, %v638
    %v640 = vpop.f32.mrb[0].mxu0
    %v641 = vpop.f32.mrb[0].mxu0
    %v642 = vadd.f32 0.0, %v641
    %v643 = vpop.f32.mrb[0].mxu0
    %644 = vmatprep.mubr.bf16.mxu0 0
    %645 = vmatmul.mubr.bf16.gmra.mrb[0].mxu0 %v505
    %v646 = vpop.f32.mrb[0].mxu0
    %v647 = vadd.f32 0.0, %v646
    %v648 = vpop.f32.mrb[0].mxu0
    %v649 = vpop.f32.mrb[0].mxu0
    %v650 = vadd.f32 0.0, %v649
    %v651 = vpop.f32.mrb[0].mxu0
    %652 = vmatprep.mubr.bf16.mxu0 0
    %653 = vmatmul.mubr.bf16.gmra.mrb[0].mxu0 %v506
    %v654 = vpop.f32.mrb[0].mxu0
    %v655 = vadd.f32 0.0, %v654
    %v656 = vpop.f32.mrb[0].mxu0
    %v657 = vpop.f32.mrb[0].mxu0
    %v658 = vadd.f32 0.0, %v657
    %v659 = vpop.f32.mrb[0].mxu0
    %660 = vmatprep.mubr.bf16.mxu0 0
    %661 = vmatmul.mubr.bf16.gmra.mrb[0].mxu0 %v507
    %v662 = vpop.f32.mrb[0].mxu0
    %v663 = vadd.f32 0.0, %v662
    %v664 = vpop.f32.mrb[0].mxu0
    %v665 = vpop.f32.mrb[0].mxu0
    %v666 = vadd.f32 0.0, %v665
    %v667 = vpop.f32.mrb[0].mxu0
    %668 = vdwg.mxu0
    %v669 = vmul.f32 %v368, %v607
    %v670 = vmul.f32 %v373, %v610
    %v671 = vmul.f32 %v378, %v615
    %v672 = vmul.f32 %v383, %v618
    %v673 = vmul.f32 %v388, %v623
    %v674 = vmul.f32 %v393, %v626
    %v675 = vmul.f32 %v398, %v631
    %v676 = vmul.f32 %v403, %v634
    %v677 = vmul.f32 %v408, %v639
    %v678 = vmul.f32 %v413, %v642
    %v679 = vmul.f32 %v418, %v647
    %v680 = vmul.f32 %v423, %v650
    %v681 = vmul.f32 %v428, %v655
    %v682 = vmul.f32 %v433, %v658
    %v683 = vmul.f32 %v438, %v663
    %v684 = vmul.f32 %v443, %v666
    %v685 = vpack.c.bf16 %v670, %v669
    %v686 = vpack.c.bf16 %v672, %v671
    %v687 = vpack.c.bf16 %v674, %v673
    %v688 = vpack.c.bf16 %v676, %v675
    %v689 = vpack.c.bf16 %v678, %v677
    %v690 = vpack.c.bf16 %v680, %v679
    %v691 = vpack.c.bf16 %v682, %v681
    %v692 = vpack.c.bf16 %v684, %v683
    %v701 = vunpack.c.l.b16 %v685
    %v702 = vunpack.c.h.b16 %v685
    %v703 = vunpack.c.l.b16 %v686
    %v704 = vunpack.c.h.b16 %v686
    %v705 = vunpack.c.l.b16 %v687
    %v706 = vunpack.c.h.b16 %v687
    %v707 = vunpack.c.l.b16 %v688
    %v708 = vunpack.c.h.b16 %v688
    %v709 = vunpack.c.l.b16 %v689
    %v710 = vunpack.c.h.b16 %v689
    %v711 = vunpack.c.l.b16 %v690
    %v712 = vunpack.c.h.b16 %v690
    %v713 = vunpack.c.l.b16 %v691
    %v714 = vunpack.c.h.b16 %v691
    %v715 = vunpack.c.l.b16 %v692
    %v716 = vunpack.c.h.b16 %v692
    %v717 = vpack.c.b16 %v701, %v701
    %v718 = vpack.c.b16 %v702, %v702
    %v719 = vpack.c.b16 %v703, %v703
    %v720 = vpack.c.b16 %v704, %v704
    %v721 = vpack.c.b16 %v705, %v705
    %v722 = vpack.c.b16 %v706, %v706
    %v723 = vpack.c.b16 %v707, %v707
    %v724 = vpack.c.b16 %v708, %v708
    %v725 = vpack.c.b16 %v709, %v709
    %v726 = vpack.c.b16 %v710, %v710
    %v727 = vpack.c.b16 %v711, %v711
    %v728 = vpack.c.b16 %v712, %v712
    %v729 = vpack.c.b16 %v713, %v713
    %v730 = vpack.c.b16 %v714, %v714
    %v731 = vpack.c.b16 %v715, %v715
    %v732 = vpack.c.b16 %v716, %v716
    %749 = vst [vmem:[%s5] sm:$0xf] %v717
    %750 = vst [vmem:[%s5 + $0x4] sm:$0xf] %v718
    %751 = vst [vmem:[%s5 + $0x8] sm:$0xf] %v719
    %752 = vst [vmem:[%s5 + $0xc] sm:$0xf] %v720
    %753 = vst [vmem:[%s5 + $0x10] sm:$0xf] %v721
    %754 = vst [vmem:[%s5 + $0x14] sm:$0xf] %v722
    %755 = vst [vmem:[%s5 + $0x18] sm:$0xf] %v723
    %756 = vst [vmem:[%s5 + $0x1c] sm:$0xf] %v724
    %757 = vst [vmem:[%s5 + $0x20] sm:$0xf] %v725
    %758 = vst [vmem:[%s5 + $0x24] sm:$0xf] %v726
    %759 = vst [vmem:[%s5 + $0x28] sm:$0xf] %v727
    %760 = vst [vmem:[%s5 + $0x2c] sm:$0xf] %v728
    %761 = vst [vmem:[%s5 + $0x30] sm:$0xf] %v729
    %762 = vst [vmem:[%s5 + $0x34] sm:$0xf] %v730
    %763 = vst [vmem:[%s5 + $0x38] sm:$0xf] %v731
    %764 = vst [vmem:[%s5 + $0x3c] sm:$0xf] %v732
  $region29: #{gcn_forward.2} parent=0 // pred_fallthru
    _
  // Predicated region
  $region30: #{gcn_forward.2} parent=0 // pred_check
    _
  $region31: #{gcn_forward.2} parent=0 // pred_check_branch
    %766 = sbr.rel (0) target = $region33
  $region32: #{gcn_forward.2} parent=0 // pred_region
    _
  $region33: #{gcn_forward.2} parent=0 // pred_fallthru
    _
  // Predicated region
  $region34: #{gcn_forward.2} parent=0 // pred_check
    _
  $region35: #{gcn_forward.2} parent=0 // pred_check_branch
    %768 = sbr.rel (0) target = $region37
  $region36: #{gcn_forward.2} parent=0 // pred_region
    _
  $region37: #{gcn_forward.2} parent=0 // pred_fallthru
    _

// kernel: gcn_forward.3
$region0: #{gcn_forward.3}
  #allocation0 [shape = 'u32[]', space=smem, size = 0x4, offset = 0x4, fixed_abs, tag = 'smem constant byte address 0x4 - core index']
  #allocation1 [shape = 'u32[144,128]{1,0:T(1,128)}', space=vmem, size = 0x12000, scoped, tag = 'internal scratch']
  #allocation2 [shape = 'f32[128,128]{1,0:T(8,128)}', space=vmem, size = 0x10000, scoped, tag = 'scratch operand']
  %s0 = inlined_call_operand.vmem [shape: s8[128,128], index: 0, kind: input, shape index: {}]
  %s1 = inlined_call_operand.vmem [shape: bf16[128,128], index: 1, kind: input, shape index: {}]
  %s2 = inlined_call_operand.vmem [shape: f32[128,1], index: 2, kind: input, shape index: {}]
  %s3 = inlined_call_operand.vmem [shape: f32[1,128], index: 3, kind: input, shape index: {}]
  %s4 = inlined_call_operand.vmem [shape: bf16[128,128], index: 4, kind: input, shape index: {}]
  %s5 = inlined_call_operand.vmem [shape: f32[128,128], index: 5, kind: output, shape index: {}]
  %s6 = sld [smem:[#allocation0]]
  $region38: #{gcn_forward.3} parent=0
    _
  %s8 = ssub.s32 1, %s6
  %s9 = scalar_select 0, %s8, %s6
  // Predicated region
  $region2: #{gcn_forward.3} parent=0 // pred_check
    _
  $region3: #{gcn_forward.3} parent=0 // pred_check_branch
    %11 = sbr.rel (0) target = $region5
  $region4: #{gcn_forward.3} parent=0 // pred_region
    _
  $region5: #{gcn_forward.3} parent=0 // pred_fallthru
    _
  // Predicated region
  $region6: #{gcn_forward.3} parent=0 // pred_check
    _
  $region7: #{gcn_forward.3} parent=0 // pred_check_branch
    %13 = sbr.rel (0) target = $region9
  $region8: #{gcn_forward.3} parent=0 // pred_region
    _
  $region9: #{gcn_forward.3} parent=0 // pred_fallthru
    _
  // Predicated region
  $region10: #{gcn_forward.3} parent=0 // pred_check
    _
  $region11: #{gcn_forward.3} parent=0 // pred_check_branch
    %15 = sbr.rel (0) target = $region13
  $region12: #{gcn_forward.3} parent=0 // pred_region
    _
  $region13: #{gcn_forward.3} parent=0 // pred_fallthru
    _
  // Predicated region
  $region14: #{gcn_forward.3} parent=0 // pred_check
    _
  $region15: #{gcn_forward.3} parent=0 // pred_check_branch
    %17 = sbr.rel (0) target = $region17
  $region16: #{gcn_forward.3} parent=0 // pred_region
    _
  $region17: #{gcn_forward.3} parent=0 // pred_fallthru
    _
  // Predicated region
  $region18: #{gcn_forward.3} parent=0 // pred_check
    _
  $region19: #{gcn_forward.3} parent=0 // pred_check_branch
    %19 = sbr.rel (0) target = $region21
  $region20: #{gcn_forward.3} parent=0 // pred_region
    _
  $region21: #{gcn_forward.3} parent=0 // pred_fallthru
    _
  %p21 = scmp.eq.s32.totalorder 0, 0
  // Predicated region
  $region22: #{gcn_forward.3} parent=0 // pred_check
    %p22 = pneg %p21
  $region23: #{gcn_forward.3} parent=0 // pred_check_branch
    %24 = sbr.rel (%p22) target = $region25
  $region24: #{gcn_forward.3} parent=0 // pred_region
    %25 = vst [vmem:[#allocation2] sm:$0xff] 0.0
    %26 = vst [vmem:[#allocation2 + $0x8] sm:$0xff] 0.0
    %27 = vst [vmem:[#allocation2 + $0x10] sm:$0xff] 0.0
    %28 = vst [vmem:[#allocation2 + $0x18] sm:$0xff] 0.0
    %29 = vst [vmem:[#allocation2 + $0x20] sm:$0xff] 0.0
    %30 = vst [vmem:[#allocation2 + $0x28] sm:$0xff] 0.0
    %31 = vst [vmem:[#allocation2 + $0x30] sm:$0xff] 0.0
    %32 = vst [vmem:[#allocation2 + $0x38] sm:$0xff] 0.0
    %33 = vst [vmem:[#allocation2 + $0x40] sm:$0xff] 0.0
    %34 = vst [vmem:[#allocation2 + $0x48] sm:$0xff] 0.0
    %35 = vst [vmem:[#allocation2 + $0x50] sm:$0xff] 0.0
    %36 = vst [vmem:[#allocation2 + $0x58] sm:$0xff] 0.0
    %37 = vst [vmem:[#allocation2 + $0x60] sm:$0xff] 0.0
    %38 = vst [vmem:[#allocation2 + $0x68] sm:$0xff] 0.0
    %39 = vst [vmem:[#allocation2 + $0x70] sm:$0xff] 0.0
    %40 = vst [vmem:[#allocation2 + $0x78] sm:$0xff] 0.0
  $region25: #{gcn_forward.3} parent=0 // pred_fallthru
    _
  %v41 = vld [vmem:[%s0] sm:$0x3]
  %v42 = vld [vmem:[%s0 + $0x2] sm:$0x3]
  %v43 = vld [vmem:[%s0 + $0x4] sm:$0x3]
  %v44 = vld [vmem:[%s0 + $0x6] sm:$0x3]
  %v45 = vld [vmem:[%s0 + $0x8] sm:$0x3]
  %v46 = vld [vmem:[%s0 + $0xa] sm:$0x3]
  %v47 = vld [vmem:[%s0 + $0xc] sm:$0x3]
  %v48 = vld [vmem:[%s0 + $0xe] sm:$0x3]
  %v49 = vld [vmem:[%s0 + $0x10] sm:$0x3]
  %v50 = vld [vmem:[%s0 + $0x12] sm:$0x3]
  %v51 = vld [vmem:[%s0 + $0x14] sm:$0x3]
  %v52 = vld [vmem:[%s0 + $0x16] sm:$0x3]
  %v53 = vld [vmem:[%s0 + $0x18] sm:$0x3]
  %v54 = vld [vmem:[%s0 + $0x1a] sm:$0x3]
  %v55 = vld [vmem:[%s0 + $0x1c] sm:$0x3]
  %v56 = vld [vmem:[%s0 + $0x1e] sm:$0x3]
  %v57 = vunpack.c.l.s8.bf16 %v41
  %v58 = vunpack.c.l.s8.bf16 %v42
  %v59 = vunpack.c.l.s8.bf16 %v43
  %v60 = vunpack.c.l.s8.bf16 %v44
  %v61 = vunpack.c.l.s8.bf16 %v45
  %v62 = vunpack.c.l.s8.bf16 %v46
  %v63 = vunpack.c.l.s8.bf16 %v47
  %v64 = vunpack.c.l.s8.bf16 %v48
  %v65 = vunpack.c.l.s8.bf16 %v49
  %v66 = vunpack.c.l.s8.bf16 %v50
  %v67 = vunpack.c.l.s8.bf16 %v51
  %v68 = vunpack.c.l.s8.bf16 %v52
  %v69 = vunpack.c.l.s8.bf16 %v53
  %v70 = vunpack.c.l.s8.bf16 %v54
  %v71 = vunpack.c.l.s8.bf16 %v55
  %v72 = vunpack.c.l.s8.bf16 %v56
  %v73 = vld [vmem:[#allocation2] sm:$0xff]
  %v74 = vld [vmem:[#allocation2 + $0x8] sm:$0xff]
  %v75 = vld [vmem:[#allocation2 + $0x10] sm:$0xff]
  %v76 = vld [vmem:[#allocation2 + $0x18] sm:$0xff]
  %v77 = vld [vmem:[#allocation2 + $0x20] sm:$0xff]
  %v78 = vld [vmem:[#allocation2 + $0x28] sm:$0xff]
  %v79 = vld [vmem:[#allocation2 + $0x30] sm:$0xff]
  %v80 = vld [vmem:[#allocation2 + $0x38] sm:$0xff]
  %v81 = vld [vmem:[#allocation2 + $0x40] sm:$0xff]
  %v82 = vld [vmem:[#allocation2 + $0x48] sm:$0xff]
  %v83 = vld [vmem:[#allocation2 + $0x50] sm:$0xff]
  %v84 = vld [vmem:[#allocation2 + $0x58] sm:$0xff]
  %v85 = vld [vmem:[#allocation2 + $0x60] sm:$0xff]
  %v86 = vld [vmem:[#allocation2 + $0x68] sm:$0xff]
  %v87 = vld [vmem:[#allocation2 + $0x70] sm:$0xff]
  %v88 = vld [vmem:[#allocation2 + $0x78] sm:$0xff]
  %v89 = vld [vmem:[%s1] sm:$0xf]
  %v90 = vld [vmem:[%s1 + $0x4] sm:$0xf]
  %v91 = vld [vmem:[%s1 + $0x8] sm:$0xf]
  %v92 = vld [vmem:[%s1 + $0xc] sm:$0xf]
  %v93 = vld [vmem:[%s1 + $0x10] sm:$0xf]
  %v94 = vld [vmem:[%s1 + $0x14] sm:$0xf]
  %v95 = vld [vmem:[%s1 + $0x18] sm:$0xf]
  %v96 = vld [vmem:[%s1 + $0x1c] sm:$0xf]
  %v97 = vld [vmem:[%s1 + $0x20] sm:$0xf]
  %v98 = vld [vmem:[%s1 + $0x24] sm:$0xf]
  %v99 = vld [vmem:[%s1 + $0x28] sm:$0xf]
  %v100 = vld [vmem:[%s1 + $0x2c] sm:$0xf]
  %v101 = vld [vmem:[%s1 + $0x30] sm:$0xf]
  %v102 = vld [vmem:[%s1 + $0x34] sm:$0xf]
  %v103 = vld [vmem:[%s1 + $0x38] sm:$0xf]
  %v104 = vld [vmem:[%s1 + $0x3c] sm:$0xf]
  %v121 = vunpack.c.l.b16 %v57
  %v122 = vunpack.c.l.b16 %v58
  %v123 = vunpack.c.l.b16 %v59
  %v124 = vunpack.c.l.b16 %v60
  %v125 = vunpack.c.l.b16 %v61
  %v126 = vunpack.c.l.b16 %v62
  %v127 = vunpack.c.l.b16 %v63
  %v128 = vunpack.c.l.b16 %v64
  %v129 = vunpack.c.l.b16 %v65
  %v130 = vunpack.c.l.b16 %v66
  %v131 = vunpack.c.l.b16 %v67
  %v132 = vunpack.c.l.b16 %v68
  %v133 = vunpack.c.l.b16 %v69
  %v134 = vunpack.c.l.b16 %v70
  %v135 = vunpack.c.l.b16 %v71
  %v136 = vunpack.c.l.b16 %v72
  %v137 = vpack.c.b16 %v122, %v121
  %v138 = vpack.c.b16 %v124, %v123
  %v139 = vpack.c.b16 %v126, %v125
  %v140 = vpack.c.b16 %v128, %v127
  %v141 = vpack.c.b16 %v130, %v129
  %v142 = vpack.c.b16 %v132, %v131
  %v143 = vpack.c.b16 %v134, %v133
  %v144 = vpack.c.b16 %v136, %v135
  %v169 = vunpack.c.l.b16 %v89
  %v170 = vunpack.c.l.b16 %v90
  %v171 = vunpack.c.l.b16 %v91
  %v172 = vunpack.c.l.b16 %v92
  %v173 = vunpack.c.l.b16 %v93
  %v174 = vunpack.c.l.b16 %v94
  %v175 = vunpack.c.l.b16 %v95
  %v176 = vunpack.c.l.b16 %v96
  %v177 = vunpack.c.l.b16 %v97
  %v178 = vunpack.c.l.b16 %v98
  %v179 = vunpack.c.l.b16 %v99
  %v180 = vunpack.c.l.b16 %v100
  %v181 = vunpack.c.l.b16 %v101
  %v182 = vunpack.c.l.b16 %v102
  %v183 = vunpack.c.l.b16 %v103
  %v184 = vunpack.c.l.b16 %v104
  %v185 = vpack.c.b16 %v170, %v169
  %v186 = vpack.c.b16 %v172, %v171
  %v187 = vpack.c.b16 %v174, %v173
  %v188 = vpack.c.b16 %v176, %v175
  %v189 = vpack.c.b16 %v178, %v177
  %v190 = vpack.c.b16 %v180, %v179
  %v191 = vpack.c.b16 %v182, %v181
  %v192 = vpack.c.b16 %v184, %v183
  %201 = vmatprep.subr.bf16.mxu0 0
  %202 = vmatpush1.bf16.msra.mxu0 %v185
  %203 = vmatprep.subr.bf16.mxu0 0
  %204 = vmatpush1.bf16.msra.mxu0 %v186
  %205 = vmatprep.subr.bf16.mxu0 0
  %206 = vmatpush1.bf16.msra.mxu0 %v187
  %207 = vmatprep.subr.bf16.mxu0 0
  %208 = vmatpush1.bf16.msra.mxu0 %v188
  %209 = vmatprep.subr.bf16.mxu0 0
  %210 = vmatpush1.bf16.msra.mxu0 %v189
  %211 = vmatprep.subr.bf16.mxu0 0
  %212 = vmatpush1.bf16.msra.mxu0 %v190
  %213 = vmatprep.subr.bf16.mxu0 0
  %214 = vmatpush1.bf16.msra.mxu0 %v191
  %215 = vmatprep.subr.bf16.mxu0 0
  %216 = vmatpush1.bf16.msra.mxu0 %v192
  %217 = vmatprep.subr.bf16.mxu0 0
  %218 = vmatpush1.bf16.msra.mxu0 0
  %219 = vmatprep.subr.bf16.mxu0 0
  %220 = vmatpush1.bf16.msra.mxu0 0
  %221 = vmatprep.subr.bf16.mxu0 0
  %222 = vmatpush1.bf16.msra.mxu0 0
  %223 = vmatprep.subr.bf16.mxu0 0
  %224 = vmatpush1.bf16.msra.mxu0 0
  %225 = vmatprep.subr.bf16.mxu0 0
  %226 = vmatpush1.bf16.msra.mxu0 0
  %227 = vmatprep.subr.bf16.mxu0 0
  %228 = vmatpush1.bf16.msra.mxu0 0
  %229 = vmatprep.subr.bf16.mxu0 0
  %230 = vmatpush1.bf16.msra.mxu0 0
  %231 = vmatprep.subr.bf16.mxu0 0
  %232 = vmatpush1.bf16.msra.mxu0 0
  %233 = vmatprep.mubr.bf16.mxu0 0
  %234 = vmatmul.mubr.bf16.gmra.mrb[0].mxu0 %v137
  %v235 = vpop.f32.mrb[0].mxu0
  %v236 = vadd.f32 0.0, %v235
  %v237 = vpop.f32.mrb[0].mxu0
  %v238 = vpop.f32.mrb[0].mxu0
  %v239 = vadd.f32 0.0, %v238
  %v240 = vpop.f32.mrb[0].mxu0
  %241 = vmatprep.mubr.bf16.mxu0 0
  %242 = vmatmul.mubr.bf16.gmra.mrb[0].mxu0 %v138
  %v243 = vpop.f32.mrb[0].mxu0
  %v244 = vadd.f32 0.0, %v243
  %v245 = vpop.f32.mrb[0].mxu0
  %v246 = vpop.f32.mrb[0].mxu0
  %v247 = vadd.f32 0.0, %v246
  %v248 = vpop.f32.mrb[0].mxu0
  %249 = vmatprep.mubr.bf16.mxu0 0
  %250 = vmatmul.mubr.bf16.gmra.mrb[0].mxu0 %v139
  %v251 = vpop.f32.mrb[0].mxu0
  %v252 = vadd.f32 0.0, %v251
  %v253 = vpop.f32.mrb[0].mxu0
  %v254 = vpop.f32.mrb[0].mxu0
  %v255 = vadd.f32 0.0, %v254
  %v256 = vpop.f32.mrb[0].mxu0
  %257 = vmatprep.mubr.bf16.mxu0 0
  %258 = vmatmul.mubr.bf16.gmra.mrb[0].mxu0 %v140
  %v259 = vpop.f32.mrb[0].mxu0
  %v260 = vadd.f32 0.0, %v259
  %v261 = vpop.f32.mrb[0].mxu0
  %v262 = vpop.f32.mrb[0].mxu0
  %v263 = vadd.f32 0.0, %v262
  %v264 = vpop.f32.mrb[0].mxu0
  %265 = vmatprep.mubr.bf16.mxu0 0
  %266 = vmatmul.mubr.bf16.gmra.mrb[0].mxu0 %v141
  %v267 = vpop.f32.mrb[0].mxu0
  %v268 = vadd.f32 0.0, %v267
  %v269 = vpop.f32.mrb[0].mxu0
  %v270 = vpop.f32.mrb[0].mxu0
  %v271 = vadd.f32 0.0, %v270
  %v272 = vpop.f32.mrb[0].mxu0
  %273 = vmatprep.mubr.bf16.mxu0 0
  %274 = vmatmul.mubr.bf16.gmra.mrb[0].mxu0 %v142
  %v275 = vpop.f32.mrb[0].mxu0
  %v276 = vadd.f32 0.0, %v275
  %v277 = vpop.f32.mrb[0].mxu0
  %v278 = vpop.f32.mrb[0].mxu0
  %v279 = vadd.f32 0.0, %v278
  %v280 = vpop.f32.mrb[0].mxu0
  %281 = vmatprep.mubr.bf16.mxu0 0
  %282 = vmatmul.mubr.bf16.gmra.mrb[0].mxu0 %v143
  %v283 = vpop.f32.mrb[0].mxu0
  %v284 = vadd.f32 0.0, %v283
  %v285 = vpop.f32.mrb[0].mxu0
  %v286 = vpop.f32.mrb[0].mxu0
  %v287 = vadd.f32 0.0, %v286
  %v288 = vpop.f32.mrb[0].mxu0
  %289 = vmatprep.mubr.bf16.mxu0 0
  %290 = vmatmul.mubr.bf16.gmra.mrb[0].mxu0 %v144
  %v291 = vpop.f32.mrb[0].mxu0
  %v292 = vadd.f32 0.0, %v291
  %v293 = vpop.f32.mrb[0].mxu0
  %v294 = vpop.f32.mrb[0].mxu0
  %v295 = vadd.f32 0.0, %v294
  %v296 = vpop.f32.mrb[0].mxu0
  %297 = vdwg.mxu0
  %v298 = vadd.f32 %v73, %v236
  %v299 = vadd.f32 %v74, %v239
  %v300 = vadd.f32 %v75, %v244
  %v301 = vadd.f32 %v76, %v247
  %v302 = vadd.f32 %v77, %v252
  %v303 = vadd.f32 %v78, %v255
  %v304 = vadd.f32 %v79, %v260
  %v305 = vadd.f32 %v80, %v263
  %v306 = vadd.f32 %v81, %v268
  %v307 = vadd.f32 %v82, %v271
  %v308 = vadd.f32 %v83, %v276
  %v309 = vadd.f32 %v84, %v279
  %v310 = vadd.f32 %v85, %v284
  %v311 = vadd.f32 %v86, %v287
  %v312 = vadd.f32 %v87, %v292
  %v313 = vadd.f32 %v88, %v295
  %314 = vst [vmem:[#allocation2] sm:$0xff] %v298
  %315 = vst [vmem:[#allocation2 + $0x8] sm:$0xff] %v299
  %316 = vst [vmem:[#allocation2 + $0x10] sm:$0xff] %v300
  %317 = vst [vmem:[#allocation2 + $0x18] sm:$0xff] %v301
  %318 = vst [vmem:[#allocation2 + $0x20] sm:$0xff] %v302
  %319 = vst [vmem:[#allocation2 + $0x28] sm:$0xff] %v303
  %320 = vst [vmem:[#allocation2 + $0x30] sm:$0xff] %v304
  %321 = vst [vmem:[#allocation2 + $0x38] sm:$0xff] %v305
  %322 = vst [vmem:[#allocation2 + $0x40] sm:$0xff] %v306
  %323 = vst [vmem:[#allocation2 + $0x48] sm:$0xff] %v307
  %324 = vst [vmem:[#allocation2 + $0x50] sm:$0xff] %v308
  %325 = vst [vmem:[#allocation2 + $0x58] sm:$0xff] %v309
  %326 = vst [vmem:[#allocation2 + $0x60] sm:$0xff] %v310
  %327 = vst [vmem:[#allocation2 + $0x68] sm:$0xff] %v311
  %328 = vst [vmem:[#allocation2 + $0x70] sm:$0xff] %v312
  %329 = vst [vmem:[#allocation2 + $0x78] sm:$0xff] %v313
  // Predicated region
  $region26: #{gcn_forward.3} parent=0 // pred_check
    %p330 = pneg %p21
  $region27: #{gcn_forward.3} parent=0 // pred_check_branch
    %332 = sbr.rel (%p330) target = $region29
  $region28: #{gcn_forward.3} parent=0 // pred_region
    %v333 = vld [vmem:[%s2] sm:$0xff]
    %v334 = vld [vmem:[%s2 + $0x8] sm:$0xff]
    %v335 = vld [vmem:[%s2 + $0x10] sm:$0xff]
    %v336 = vld [vmem:[%s2 + $0x18] sm:$0xff]
    %v337 = vld [vmem:[%s2 + $0x20] sm:$0xff]
    %v338 = vld [vmem:[%s2 + $0x28] sm:$0xff]
    %v339 = vld [vmem:[%s2 + $0x30] sm:$0xff]
    %v340 = vld [vmem:[%s2 + $0x38] sm:$0xff]
    %v341 = vld [vmem:[%s2 + $0x40] sm:$0xff]
    %v342 = vld [vmem:[%s2 + $0x48] sm:$0xff]
    %v343 = vld [vmem:[%s2 + $0x50] sm:$0xff]
    %v344 = vld [vmem:[%s2 + $0x58] sm:$0xff]
    %v345 = vld [vmem:[%s2 + $0x60] sm:$0xff]
    %v346 = vld [vmem:[%s2 + $0x68] sm:$0xff]
    %v347 = vld [vmem:[%s2 + $0x70] sm:$0xff]
    %v348 = vld [vmem:[%s2 + $0x78] sm:$0xff]
    %v349 = vld [vmem:[#allocation2] sm:$0xff]
    %v350 = vld [vmem:[#allocation2 + $0x8] sm:$0xff]
    %v351 = vld [vmem:[#allocation2 + $0x10] sm:$0xff]
    %v352 = vld [vmem:[#allocation2 + $0x18] sm:$0xff]
    %v353 = vld [vmem:[#allocation2 + $0x20] sm:$0xff]
    %v354 = vld [vmem:[#allocation2 + $0x28] sm:$0xff]
    %v355 = vld [vmem:[#allocation2 + $0x30] sm:$0xff]
    %v356 = vld [vmem:[#allocation2 + $0x38] sm:$0xff]
    %v357 = vld [vmem:[#allocation2 + $0x40] sm:$0xff]
    %v358 = vld [vmem:[#allocation2 + $0x48] sm:$0xff]
    %v359 = vld [vmem:[#allocation2 + $0x50] sm:$0xff]
    %v360 = vld [vmem:[#allocation2 + $0x58] sm:$0xff]
    %v361 = vld [vmem:[#allocation2 + $0x60] sm:$0xff]
    %v362 = vld [vmem:[#allocation2 + $0x68] sm:$0xff]
    %v363 = vld [vmem:[#allocation2 + $0x70] sm:$0xff]
    %v364 = vld [vmem:[#allocation2 + $0x78] sm:$0xff]
    %366 = vset.pattern.permute.xlu0 0
    %367 = vperm.xlu0 %366, %v333
    %v368 = vpop.permute.xlu0 %367
    %371 = vset.pattern.permute.xlu0 0
    %372 = vperm.xlu0 %371, %v334
    %v373 = vpop.permute.xlu0 %372
    %376 = vset.pattern.permute.xlu0 0
    %377 = vperm.xlu0 %376, %v335
    %v378 = vpop.permute.xlu0 %377
    %381 = vset.pattern.permute.xlu0 0
    %382 = vperm.xlu0 %381, %v336
    %v383 = vpop.permute.xlu0 %382
    %386 = vset.pattern.permute.xlu0 0
    %387 = vperm.xlu0 %386, %v337
    %v388 = vpop.permute.xlu0 %387
    %391 = vset.pattern.permute.xlu0 0
    %392 = vperm.xlu0 %391, %v338
    %v393 = vpop.permute.xlu0 %392
    %396 = vset.pattern.permute.xlu0 0
    %397 = vperm.xlu0 %396, %v339
    %v398 = vpop.permute.xlu0 %397
    %401 = vset.pattern.permute.xlu0 0
    %402 = vperm.xlu0 %401, %v340
    %v403 = vpop.permute.xlu0 %402
    %406 = vset.pattern.permute.xlu0 0
    %407 = vperm.xlu0 %406, %v341
    %v408 = vpop.permute.xlu0 %407
    %411 = vset.pattern.permute.xlu0 0
    %412 = vperm.xlu0 %411, %v342
    %v413 = vpop.permute.xlu0 %412
    %416 = vset.pattern.permute.xlu0 0
    %417 = vperm.xlu0 %416, %v343
    %v418 = vpop.permute.xlu0 %417
    %421 = vset.pattern.permute.xlu0 0
    %422 = vperm.xlu0 %421, %v344
    %v423 = vpop.permute.xlu0 %422
    %426 = vset.pattern.permute.xlu0 0
    %427 = vperm.xlu0 %426, %v345
    %v428 = vpop.permute.xlu0 %427
    %431 = vset.pattern.permute.xlu0 0
    %432 = vperm.xlu0 %431, %v346
    %v433 = vpop.permute.xlu0 %432
    %436 = vset.pattern.permute.xlu0 0
    %437 = vperm.xlu0 %436, %v347
    %v438 = vpop.permute.xlu0 %437
    %441 = vset.pattern.permute.xlu0 0
    %442 = vperm.xlu0 %441, %v348
    %v443 = vpop.permute.xlu0 %442
    %v445 = vmul.f32 %v368, %v349
    %v446 = vmul.f32 %v373, %v350
    %v447 = vmul.f32 %v378, %v351
    %v448 = vmul.f32 %v383, %v352
    %v449 = vmul.f32 %v388, %v353
    %v450 = vmul.f32 %v393, %v354
    %v451 = vmul.f32 %v398, %v355
    %v452 = vmul.f32 %v403, %v356
    %v453 = vmul.f32 %v408, %v357
    %v454 = vmul.f32 %v413, %v358
    %v455 = vmul.f32 %v418, %v359
    %v456 = vmul.f32 %v423, %v360
    %v457 = vmul.f32 %v428, %v361
    %v458 = vmul.f32 %v433, %v362
    %v459 = vmul.f32 %v438, %v363
    %v460 = vmul.f32 %v443, %v364
    %v461 = vld [vmem:[%s3] sm:$0x1]
    %v463 = vlaneseq
    %v464 = vshrl.u32 %v463, 7
    %v465 = vsub.s32 0, %v464
    %v466 = vrot.slane %v461, %v465
    %v468 = vadd.f32 %v445, %v466
    %v469 = vadd.f32 %v446, %v466
    %v470 = vadd.f32 %v447, %v466
    %v471 = vadd.f32 %v448, %v466
    %v472 = vadd.f32 %v449, %v466
    %v473 = vadd.f32 %v450, %v466
    %v474 = vadd.f32 %v451, %v466
    %v475 = vadd.f32 %v452, %v466
    %v476 = vadd.f32 %v453, %v466
    %v477 = vadd.f32 %v454, %v466
    %v478 = vadd.f32 %v455, %v466
    %v479 = vadd.f32 %v456, %v466
    %v480 = vadd.f32 %v457, %v466
    %v481 = vadd.f32 %v458, %v466
    %v482 = vadd.f32 %v459, %v466
    %v483 = vadd.f32 %v460, %v466
    %484 = vst [vmem:[%s5] sm:$0xff] %v468
    %485 = vst [vmem:[%s5 + $0x8] sm:$0xff] %v469
    %486 = vst [vmem:[%s5 + $0x10] sm:$0xff] %v470
    %487 = vst [vmem:[%s5 + $0x18] sm:$0xff] %v471
    %488 = vst [vmem:[%s5 + $0x20] sm:$0xff] %v472
    %489 = vst [vmem:[%s5 + $0x28] sm:$0xff] %v473
    %490 = vst [vmem:[%s5 + $0x30] sm:$0xff] %v474
    %491 = vst [vmem:[%s5 + $0x38] sm:$0xff] %v475
    %492 = vst [vmem:[%s5 + $0x40] sm:$0xff] %v476
    %493 = vst [vmem:[%s5 + $0x48] sm:$0xff] %v477
    %494 = vst [vmem:[%s5 + $0x50] sm:$0xff] %v478
    %495 = vst [vmem:[%s5 + $0x58] sm:$0xff] %v479
    %496 = vst [vmem:[%s5 + $0x60] sm:$0xff] %v480
    %497 = vst [vmem:[%s5 + $0x68] sm:$0xff] %v481
    %498 = vst [vmem:[%s5 + $0x70] sm:$0xff] %v482
    %499 = vst [vmem:[%s5 + $0x78] sm:$0xff] %v483
  $region29: #{gcn_forward.3} parent=0 // pred_fallthru
    _
  // Predicated region
  $region30: #{gcn_forward.3} parent=0 // pred_check
    _
  $region31: #{gcn_forward.3} parent=0 // pred_check_branch
    %501 = sbr.rel (0) target = $region33
  $region32: #{gcn_forward.3} parent=0 // pred_region
    _
  $region33: #{gcn_forward.3} parent=0 // pred_fallthru
    _
  // Predicated region
  $region34: #{gcn_forward.3} parent=0 // pred_check
    _
  $region35: #{gcn_forward.3} parent=0 // pred_check_branch
    %503 = sbr.rel (0) target = $region37
  $region36: #{gcn_forward.3} parent=0 // pred_region
    _
  $region37: #{gcn_forward.3} parent=0 // pred_fallthru
    _

</llo_original>
